<compile_context>
chip_gen: v7x
topology: tpu7x:2x2x1
jax: 0.10.0
libtpu: 0.0.40
codegen_flags: <defaults>
</compile_context>

<pallas_src>
import functools

import jax
import jax.numpy as jnp
from jax.experimental import pallas as pl
from jax.experimental.pallas import tpu as pltpu


def _critic_kernel(x_ref, w1_ref, b1_ref, w2_ref, b2_ref, w3_ref, b3_ref,
                   w4_ref, b4_ref, out_ref):
    """Whole MLP forward for one batch tile, entirely in VMEM.

    Weights W1..W3 are bf16 (MXU operands); biases, the W4 row and all
    elementwise math are f32 (VPU).  Accumulation is f32 via
    preferred_element_type.
    """
    x = x_ref[...].astype(jnp.bfloat16)

    # Linear(state_dim, mid_dim) + ReLU
    h = jnp.dot(x, w1_ref[...], preferred_element_type=jnp.float32) + b1_ref[...]
    h = jnp.maximum(h, 0.0)

    # Linear(mid_dim, mid_dim) + ReLU
    h = jnp.dot(h.astype(jnp.bfloat16), w2_ref[...],
                preferred_element_type=jnp.float32) + b2_ref[...]
    h = jnp.maximum(h, 0.0)

    # Linear(mid_dim, mid_dim) + Hardswish: x * clamp(x + 3, 0, 6) / 6
    h = jnp.dot(h.astype(jnp.bfloat16), w3_ref[...],
                preferred_element_type=jnp.float32) + b3_ref[...]
    h = h * jnp.clip(h + 3.0, 0.0, 6.0) * (1.0 / 6.0)

    # Linear(mid_dim, 1): VPU multiply + cross-lane reduce instead of a width-1
    # MXU matmul.
    v = jnp.sum(h * w4_ref[...], axis=-1, keepdims=True) + b4_ref[...]
    out_ref[...] = v.astype(out_ref.dtype)


def _run_tile(x, params, block_rows, n_blocks, vmem_limit):
    """One pallas_call over `n_blocks` tiles of `block_rows` rows of `x`.

    Only blocks [0, n_blocks) are read, so `x` may have more rows than
    n_blocks * block_rows (the tail is handled by a separate call).
    """
    w1, b1, w2, b2, w3, b3, w4_row, b4 = params
    state_dim = x.shape[1]
    mid_dim = w1.shape[1]
    rows = block_rows * n_blocks

    def _resident(shape):
        # Constant block index across the grid -> single resident VMEM copy
        # (no dead double-buffer).
        return pl.BlockSpec(shape, lambda i: (0, 0), pipeline_mode=pl.Buffered(1))

    weight_bytes = (2 * (state_dim * mid_dim + 2 * mid_dim * mid_dim)  # bf16 W1..W3
                    + 4 * (4 * mid_dim + 1))                            # f32 biases + W4 row
    cost = pl.CostEstimate(
        flops=2 * rows * (state_dim * mid_dim + 2 * mid_dim * mid_dim + mid_dim),
        transcendentals=0,
        bytes_accessed=rows * (state_dim * 4 + 4) + weight_bytes,
    )

    return pl.pallas_call(
        _critic_kernel,
        out_shape=jax.ShapeDtypeStruct((rows, 1), jnp.float32),
        grid_spec=pltpu.PrefetchScalarGridSpec(
            num_scalar_prefetch=0,
            grid=(n_blocks,),
            in_specs=[
                pl.BlockSpec((block_rows, state_dim), lambda i: (i, 0)),   # state tile
                _resident((state_dim, mid_dim)), _resident((1, mid_dim)),  # W1, b1
                _resident((mid_dim, mid_dim)),   _resident((1, mid_dim)),  # W2, b2
                _resident((mid_dim, mid_dim)),   _resident((1, mid_dim)),  # W3, b3
                _resident((1, mid_dim)),         _resident((1, 1)),        # W4 row, b4
            ],
            out_specs=pl.BlockSpec((block_rows, 1), lambda i: (i, 0)),
        ),
        compiler_params=pltpu.CompilerParams(
            dimension_semantics=("parallel",),
            vmem_limit_bytes=vmem_limit),
        cost_estimate=cost,
    )(x, w1, b1, w2, b2, w3, b3, w4_row, b4)


@functools.partial(jax.jit, static_argnames=("block_b_max",))
def critic_ppo_forward(state, params, block_b_max=1024):
    """state: (B, state_dim) float32 -> value: (B, 1) float32."""
    w1 = params[0]
    assert state.ndim == 2
    B, state_dim = state.shape
    mid_dim = w1.shape[1]

    # ---- generation-aware VMEM budget (leave >=25% headroom for compiler
    #      internal scratch / semaphores; ~48 MiB on v7x, ~96 MiB on v5e/v6e).
    try:
        info = pltpu.get_tpu_info()
        vmem_cap = int(getattr(info, "vmem_capacity_bytes", 64 << 20))
    except Exception:  # non-TPU tracing / older API: assume the smallest (v7x)
        vmem_cap = 64 << 20
    vmem_limit = max(32 << 20, int(0.75 * vmem_cap))

    # ---- VMEM footprint: resident weights + per-row tile/activation cost ----
    w_bytes = (2 * (state_dim * mid_dim + 2 * mid_dim * mid_dim)   # bf16 W1..W3
               + 4 * (4 * mid_dim + 1))                             # f32 biases + W4 row
    per_row = 10 * state_dim + 16 * mid_dim + 8   # x tiles (x2) + f32/bf16 activations + out
    rows_budget = vmem_limit - w_bytes - (4 << 20)  # slack for compiler scratch
    if rows_budget < 8 * per_row:
        # TODO(synk): tile mid_dim over an 'arbitrary' grid axis (or stream W2/W3
        # from HBM with manual double-buffered DMA) once resident weights stop
        # fitting VMEM on this generation.
        raise NotImplementedError(
            f"mid_dim={mid_dim}: resident weights ({w_bytes / 2**20:.1f} MiB) leave no "
            f"room for activations within the VMEM budget ({vmem_limit / 2**20:.1f} MiB)")
    max_rows = max(8, (rows_budget // per_row) // 8 * 8)

    # ---- batch tile selection: as large as possible, but keep >= 2 main grid
    #      steps when B allows (v7x megacore) and stay within the VMEM budget.
    n_steps = max(2, pl.cdiv(B, block_b_max))
    block_b = (B // n_steps) // 8 * 8
    block_b = max(8, min(block_b, block_b_max, max_rows))

    n_full = B // block_b          # full blocks, read straight from `state`
    tail = B - n_full * block_b    # ragged remainder (< block_b rows)

    outs = []
    if n_full > 0:
        # Main call: reads only the first n_full*block_b rows of the UN-padded
        # state array (no full-array pad / copy).
        outs.append(_run_tile(state, params, block_b, n_full, vmem_limit))
    if tail > 0:
        # Tail call: slice just the remainder (tiny copy), pad to a multiple of
        # 8 sublanes, run one small grid step, slice the valid rows back.
        tail_pad = 8 * pl.cdiv(tail, 8)
        x_tail = state[n_full * block_b:]
        if tail_pad != tail:
            x_tail = jnp.pad(x_tail, ((0, tail_pad - tail), (0, 0)))
        outs.append(_run_tile(x_tail, params, tail_pad, 1, vmem_limit)[:tail])

    return outs[0] if len(outs) == 1 else jnp.concatenate(outs, axis=0)


def _orthogonal(key, shape, gain=1.0):
    """Deterministic orthogonal init (like torch.nn.init.orthogonal_)."""
    rows, cols = shape
    n = max(rows, cols)
    a = jax.random.normal(key, (n, n), dtype=jnp.float32)
    q, r = jnp.linalg.qr(a)
    q = q * jnp.sign(jnp.diag(r))
    return gain * q[:rows, :cols]


def init_params(key, state_dim, mid_dim):
    """Weights stored as (in_features, out_features) = torch Linear.weight.T.

    W1..W3 in bf16 (MXU operands); biases and the final row weight in f32.
    Layers 1..3 use PyTorch-Linear-style kaiming-uniform bounds; the last layer
    mimics layer_norm(std=0.5): orthogonal weight, bias 1e-6.
    NOTE: bf16 weights are a deliberate perf choice; numerics differ from a
    pure-f32 PyTorch CriticPPO at the ~1e-3 relative-error level.
    """
    ks = jax.random.split(key, 7)

    def _uniform(k, fan_in, shape):
        bound = 1.0 / float(fan_in) ** 0.5
        return jax.random.uniform(k, shape, jnp.float32, -bound, bound)

    w1 = _uniform(ks[0], state_dim, (state_dim, mid_dim)).astype(jnp.bfloat16)
    b1 = _uniform(ks[1], state_dim, (1, mid_dim))
    w2 = _uniform(ks[2], mid_dim, (mid_dim, mid_dim)).astype(jnp.bfloat16)
    b2 = _uniform(ks[3], mid_dim, (1, mid_dim))
    w3 = _uniform(ks[4], mid_dim, (mid_dim, mid_dim)).astype(jnp.bfloat16)
    b3 = _uniform(ks[5], mid_dim, (1, mid_dim))
    w4_row = _orthogonal(ks[6], (1, mid_dim), gain=0.5)  # row of Linear(mid,1).weight
    b4 = jnp.full((1, 1), 1e-6, jnp.float32)
    return (w1, b1, w2, b2, w3, b3, w4_row, b4)


def _reference_forward(state, params):
    """Pure-JAX reference with identical numerics (bf16 operands, f32 accum)."""
    w1, b1, w2, b2, w3, b3, w4_row, b4 = params
    h = jnp.dot(state.astype(jnp.bfloat16), w1,
                preferred_element_type=jnp.float32) + b1
    h = jnp.maximum(h, 0.0)
    h = jnp.dot(h.astype(jnp.bfloat16), w2,
                preferred_element_type=jnp.float32) + b2
    h = jnp.maximum(h, 0.0)
    h = jnp.dot(h.astype(jnp.bfloat16), w3,
                preferred_element_type=jnp.float32) + b3
    h = h * jnp.clip(h + 3.0, 0.0, 6.0) / 6.0
    return jnp.sum(h * w4_row, axis=-1, keepdims=True) + b4


if __name__ == "__main__":
    key = jax.random.PRNGKey(0)
    k_x, k_p = jax.random.split(key)

    # mid_dim=128 is lane-aligned (use 256 to fully fill the 256-wide MXUs of
    # v6e/v7x if the model allows); state_dim=16 as a small state vector.
    state_dim, mid_dim = 16, 128
    params = init_params(k_p, state_dim, mid_dim)

    # batch=200 exercises the main path (block_b=96 -> 2 grid steps, feeding
    # both v7x TensorCores) plus an 8-row tail; batch=5 exercises the
    # tail-only (padded-to-8) path.
    for batch in (200, 5):
        x = jax.random.normal(jax.random.fold_in(k_x, batch),
                              (batch, state_dim), jnp.float32)
        value = jax.block_until_ready(critic_ppo_forward(x, params))
        ref = _reference_forward(x, params)
        assert value.shape == (batch, 1)
        assert jnp.allclose(value, ref, atol=1e-3, rtol=1e-2), (batch, value, ref)

    print("KERNEL_OK")
</pallas_src>

<mosaic_0001>
module attributes {stable_mosaic.version = 11 : i64} {
  func.func @_critic_kernel(%arg0: i32, %arg1: memref<8x16xf32, #tpu.memory_space<vmem>>, %arg2: memref<16x128xbf16, #tpu.memory_space<vmem>>, %arg3: memref<1x128xf32, #tpu.memory_space<vmem>>, %arg4: memref<128x128xbf16, #tpu.memory_space<vmem>>, %arg5: memref<1x128xf32, #tpu.memory_space<vmem>>, %arg6: memref<128x128xbf16, #tpu.memory_space<vmem>>, %arg7: memref<1x128xf32, #tpu.memory_space<vmem>>, %arg8: memref<1x128xf32, #tpu.memory_space<vmem>>, %arg9: memref<1x1xf32, #tpu.memory_space<vmem>>, %arg10: memref<8x1xf32, #tpu.memory_space<vmem>>) attributes {dimension_semantics = [#tpu.dimension_semantics<parallel>], iteration_bounds = array<i64: 1>, scalar_prefetch = 0 : i64, scratch_operands = 0 : i64, tpu.core_type = #tpu.core_type<tc>, window_params = [{transform_indices = @transform_0, window_bounds = array<i64: 8, 16>}, {pipeline_mode = #tpu.pipeline_mode<synchronous>, transform_indices = @transform_1, window_bounds = array<i64: 16, 128>}, {pipeline_mode = #tpu.pipeline_mode<synchronous>, transform_indices = @transform_2, window_bounds = array<i64: 1, 128>}, {pipeline_mode = #tpu.pipeline_mode<synchronous>, transform_indices = @transform_3, window_bounds = array<i64: 128, 128>}, {pipeline_mode = #tpu.pipeline_mode<synchronous>, transform_indices = @transform_4, window_bounds = array<i64: 1, 128>}, {pipeline_mode = #tpu.pipeline_mode<synchronous>, transform_indices = @transform_5, window_bounds = array<i64: 128, 128>}, {pipeline_mode = #tpu.pipeline_mode<synchronous>, transform_indices = @transform_6, window_bounds = array<i64: 1, 128>}, {pipeline_mode = #tpu.pipeline_mode<synchronous>, transform_indices = @transform_7, window_bounds = array<i64: 1, 128>}, {pipeline_mode = #tpu.pipeline_mode<synchronous>, transform_indices = @transform_8, window_bounds = array<i64: 1, 1>}, {transform_indices = @transform_9, window_bounds = array<i64: 8, 1>}]} {
    %c0 = arith.constant 0 : index
    %c0_0 = arith.constant 0 : index
    %0 = vector.load %arg1[%c0, %c0_0] : memref<8x16xf32, #tpu.memory_space<vmem>>, vector<8x16xf32>
    %1 = arith.truncf %0 : vector<8x16xf32> to vector<8x16xbf16>
    %c0_1 = arith.constant 0 : index
    %c0_2 = arith.constant 0 : index
    %2 = vector.load %arg2[%c0_1, %c0_2] : memref<16x128xbf16, #tpu.memory_space<vmem>>, vector<16x128xbf16>
    %cst = arith.constant dense<0.000000e+00> : vector<8x128xf32>
    %3 = tpu.matmul %1, %2, %cst {dimension_numbers = #tpu.dot_dimension_numbers<[1], [0], [0], [1], [0, 0, 1, 1], [], []>} : vector<8x16xbf16>, vector<16x128xbf16>, vector<8x128xf32> -> vector<8x128xf32>
    %c0_3 = arith.constant 0 : index
    %c0_4 = arith.constant 0 : index
    %4 = vector.load %arg3[%c0_3, %c0_4] : memref<1x128xf32, #tpu.memory_space<vmem>>, vector<1x128xf32>
    %5 = vector.broadcast %4 : vector<1x128xf32> to vector<8x128xf32>
    %6 = arith.addf %3, %5 : vector<8x128xf32>
    %cst_5 = arith.constant 0.000000e+00 : f32
    %7 = vector.broadcast %cst_5 : f32 to vector<8x128xf32>
    %8 = arith.maximumf %6, %7 : vector<8x128xf32>
    %9 = arith.truncf %8 : vector<8x128xf32> to vector<8x128xbf16>
    %c0_6 = arith.constant 0 : index
    %c0_7 = arith.constant 0 : index
    %10 = vector.load %arg4[%c0_6, %c0_7] : memref<128x128xbf16, #tpu.memory_space<vmem>>, vector<128x128xbf16>
    %cst_8 = arith.constant dense<0.000000e+00> : vector<8x128xf32>
    %11 = tpu.matmul %9, %10, %cst_8 {dimension_numbers = #tpu.dot_dimension_numbers<[1], [0], [0], [1], [0, 0, 1, 1], [], []>} : vector<8x128xbf16>, vector<128x128xbf16>, vector<8x128xf32> -> vector<8x128xf32>
    %c0_9 = arith.constant 0 : index
    %c0_10 = arith.constant 0 : index
    %12 = vector.load %arg5[%c0_9, %c0_10] : memref<1x128xf32, #tpu.memory_space<vmem>>, vector<1x128xf32>
    %13 = vector.broadcast %12 : vector<1x128xf32> to vector<8x128xf32>
    %14 = arith.addf %11, %13 : vector<8x128xf32>
    %cst_11 = arith.constant 0.000000e+00 : f32
    %15 = vector.broadcast %cst_11 : f32 to vector<8x128xf32>
    %16 = arith.maximumf %14, %15 : vector<8x128xf32>
    %17 = arith.truncf %16 : vector<8x128xf32> to vector<8x128xbf16>
    %c0_12 = arith.constant 0 : index
    %c0_13 = arith.constant 0 : index
    %18 = vector.load %arg6[%c0_12, %c0_13] : memref<128x128xbf16, #tpu.memory_space<vmem>>, vector<128x128xbf16>
    %cst_14 = arith.constant dense<0.000000e+00> : vector<8x128xf32>
    %19 = tpu.matmul %17, %18, %cst_14 {dimension_numbers = #tpu.dot_dimension_numbers<[1], [0], [0], [1], [0, 0, 1, 1], [], []>} : vector<8x128xbf16>, vector<128x128xbf16>, vector<8x128xf32> -> vector<8x128xf32>
    %c0_15 = arith.constant 0 : index
    %c0_16 = arith.constant 0 : index
    %20 = vector.load %arg7[%c0_15, %c0_16] : memref<1x128xf32, #tpu.memory_space<vmem>>, vector<1x128xf32>
    %21 = vector.broadcast %20 : vector<1x128xf32> to vector<8x128xf32>
    %22 = arith.addf %19, %21 : vector<8x128xf32>
    %cst_17 = arith.constant 3.000000e+00 : f32
    %23 = vector.broadcast %cst_17 : f32 to vector<8x128xf32>
    %24 = arith.addf %22, %23 : vector<8x128xf32>
    %cst_18 = arith.constant 0.000000e+00 : f32
    %cst_19 = arith.constant 6.000000e+00 : f32
    %25 = vector.broadcast %cst_18 : f32 to vector<8x128xf32>
    %26 = arith.maximumf %25, %24 : vector<8x128xf32>
    %27 = vector.broadcast %cst_19 : f32 to vector<8x128xf32>
    %28 = arith.minimumf %27, %26 : vector<8x128xf32>
    %29 = arith.mulf %22, %28 : vector<8x128xf32>
    %cst_20 = arith.constant 0.166666672 : f32
    %30 = vector.broadcast %cst_20 : f32 to vector<8x128xf32>
    %31 = arith.mulf %29, %30 : vector<8x128xf32>
    %c0_21 = arith.constant 0 : index
    %c0_22 = arith.constant 0 : index
    %32 = vector.load %arg8[%c0_21, %c0_22] : memref<1x128xf32, #tpu.memory_space<vmem>>, vector<1x128xf32>
    %33 = vector.broadcast %32 : vector<1x128xf32> to vector<8x128xf32>
    %34 = arith.mulf %31, %33 : vector<8x128xf32>
    %cst_23 = arith.constant dense<0.000000e+00> : vector<8xf32>
    %35 = vector.multi_reduction <add>, %34, %cst_23 [1] : vector<8x128xf32> to vector<8xf32>
    %36 = vector.shape_cast %35 : vector<8xf32> to vector<8x1xf32>
    %c0_24 = arith.constant 0 : index
    %c0_25 = arith.constant 0 : index
    %37 = vector.load %arg9[%c0_24, %c0_25] : memref<1x1xf32, #tpu.memory_space<vmem>>, vector<1x1xf32>
    %38 = vector.broadcast %37 : vector<1x1xf32> to vector<8x1xf32>
    %39 = arith.addf %36, %38 : vector<8x1xf32>
    %c0_26 = arith.constant 0 : index
    %c0_27 = arith.constant 0 : index
    %40 = vector.load %arg10[%c0_26, %c0_27] : memref<8x1xf32, #tpu.memory_space<vmem>>, vector<8x1xf32>
    tpu.vector_store %arg10[%c0_26, %c0_27], %39 {strides = array<i32>} : memref<8x1xf32, #tpu.memory_space<vmem>>, vector<8x1xf32>,
    return
  }
  func.func @transform_0(%arg0: i32) -> (i32, i32) {
    %c0_i32 = arith.constant 0 : i32
    %c0_i32_0 = arith.constant 0 : i32
    return %arg0, %c0_i32 : i32, i32
  }
  func.func @transform_1(%arg0: i32) -> (i32, i32) {
    %c0_i32 = arith.constant 0 : i32
    %c0_i32_0 = arith.constant 0 : i32
    %c0_i32_1 = arith.constant 0 : i32
    return %c0_i32, %c0_i32_0 : i32, i32
  }
  func.func @transform_2(%arg0: i32) -> (i32, i32) {
    %c0_i32 = arith.constant 0 : i32
    %c0_i32_0 = arith.constant 0 : i32
    %c0_i32_1 = arith.constant 0 : i32
    return %c0_i32, %c0_i32_0 : i32, i32
  }
  func.func @transform_3(%arg0: i32) -> (i32, i32) {
    %c0_i32 = arith.constant 0 : i32
    %c0_i32_0 = arith.constant 0 : i32
    %c0_i32_1 = arith.constant 0 : i32
    return %c0_i32, %c0_i32_0 : i32, i32
  }
  func.func @transform_4(%arg0: i32) -> (i32, i32) {
    %c0_i32 = arith.constant 0 : i32
    %c0_i32_0 = arith.constant 0 : i32
    %c0_i32_1 = arith.constant 0 : i32
    return %c0_i32, %c0_i32_0 : i32, i32
  }
  func.func @transform_5(%arg0: i32) -> (i32, i32) {
    %c0_i32 = arith.constant 0 : i32
    %c0_i32_0 = arith.constant 0 : i32
    %c0_i32_1 = arith.constant 0 : i32
    return %c0_i32, %c0_i32_0 : i32, i32
  }
  func.func @transform_6(%arg0: i32) -> (i32, i32) {
    %c0_i32 = arith.constant 0 : i32
    %c0_i32_0 = arith.constant 0 : i32
    %c0_i32_1 = arith.constant 0 : i32
    return %c0_i32, %c0_i32_0 : i32, i32
  }
  func.func @transform_7(%arg0: i32) -> (i32, i32) {
    %c0_i32 = arith.constant 0 : i32
    %c0_i32_0 = arith.constant 0 : i32
    %c0_i32_1 = arith.constant 0 : i32
    return %c0_i32, %c0_i32_0 : i32, i32
  }
  func.func @transform_8(%arg0: i32) -> (i32, i32) {
    %c0_i32 = arith.constant 0 : i32
    %c0_i32_0 = arith.constant 0 : i32
    %c0_i32_1 = arith.constant 0 : i32
    return %c0_i32, %c0_i32_0 : i32, i32
  }
  func.func @transform_9(%arg0: i32) -> (i32, i32) {
    %c0_i32 = arith.constant 0 : i32
    %c0_i32_0 = arith.constant 0 : i32
    return %arg0, %c0_i32 : i32, i32
  }
}

module attributes {stable_mosaic.version = 11 : i64} {
  func.func @_critic_kernel(%arg0: i32, %arg1: memref<96x16xf32, #tpu.memory_space<vmem>>, %arg2: memref<16x128xbf16, #tpu.memory_space<vmem>>, %arg3: memref<1x128xf32, #tpu.memory_space<vmem>>, %arg4: memref<128x128xbf16, #tpu.memory_space<vmem>>, %arg5: memref<1x128xf32, #tpu.memory_space<vmem>>, %arg6: memref<128x128xbf16, #tpu.memory_space<vmem>>, %arg7: memref<1x128xf32, #tpu.memory_space<vmem>>, %arg8: memref<1x128xf32, #tpu.memory_space<vmem>>, %arg9: memref<1x1xf32, #tpu.memory_space<vmem>>, %arg10: memref<96x1xf32, #tpu.memory_space<vmem>>) attributes {dimension_semantics = [#tpu.dimension_semantics<parallel>], iteration_bounds = array<i64: 2>, scalar_prefetch = 0 : i64, scratch_operands = 0 : i64, tpu.core_type = #tpu.core_type<tc>, window_params = [{transform_indices = @transform_0, window_bounds = array<i64: 96, 16>}, {pipeline_mode = #tpu.pipeline_mode<synchronous>, transform_indices = @transform_1, window_bounds = array<i64: 16, 128>}, {pipeline_mode = #tpu.pipeline_mode<synchronous>, transform_indices = @transform_2, window_bounds = array<i64: 1, 128>}, {pipeline_mode = #tpu.pipeline_mode<synchronous>, transform_indices = @transform_3, window_bounds = array<i64: 128, 128>}, {pipeline_mode = #tpu.pipeline_mode<synchronous>, transform_indices = @transform_4, window_bounds = array<i64: 1, 128>}, {pipeline_mode = #tpu.pipeline_mode<synchronous>, transform_indices = @transform_5, window_bounds = array<i64: 128, 128>}, {pipeline_mode = #tpu.pipeline_mode<synchronous>, transform_indices = @transform_6, window_bounds = array<i64: 1, 128>}, {pipeline_mode = #tpu.pipeline_mode<synchronous>, transform_indices = @transform_7, window_bounds = array<i64: 1, 128>}, {pipeline_mode = #tpu.pipeline_mode<synchronous>, transform_indices = @transform_8, window_bounds = array<i64: 1, 1>}, {transform_indices = @transform_9, window_bounds = array<i64: 96, 1>}]} {
    %c0 = arith.constant 0 : index
    %c0_0 = arith.constant 0 : index
    %0 = vector.load %arg1[%c0, %c0_0] : memref<96x16xf32, #tpu.memory_space<vmem>>, vector<96x16xf32>
    %1 = arith.truncf %0 : vector<96x16xf32> to vector<96x16xbf16>
    %c0_1 = arith.constant 0 : index
    %c0_2 = arith.constant 0 : index
    %2 = vector.load %arg2[%c0_1, %c0_2] : memref<16x128xbf16, #tpu.memory_space<vmem>>, vector<16x128xbf16>
    %cst = arith.constant dense<0.000000e+00> : vector<96x128xf32>
    %3 = tpu.matmul %1, %2, %cst {dimension_numbers = #tpu.dot_dimension_numbers<[1], [0], [0], [1], [0, 0, 1, 1], [], []>} : vector<96x16xbf16>, vector<16x128xbf16>, vector<96x128xf32> -> vector<96x128xf32>
    %c0_3 = arith.constant 0 : index
    %c0_4 = arith.constant 0 : index
    %4 = vector.load %arg3[%c0_3, %c0_4] : memref<1x128xf32, #tpu.memory_space<vmem>>, vector<1x128xf32>
    %5 = vector.broadcast %4 : vector<1x128xf32> to vector<96x128xf32>
    %6 = arith.addf %3, %5 : vector<96x128xf32>
    %cst_5 = arith.constant 0.000000e+00 : f32
    %7 = vector.broadcast %cst_5 : f32 to vector<96x128xf32>
    %8 = arith.maximumf %6, %7 : vector<96x128xf32>
    %9 = arith.truncf %8 : vector<96x128xf32> to vector<96x128xbf16>
    %c0_6 = arith.constant 0 : index
    %c0_7 = arith.constant 0 : index
    %10 = vector.load %arg4[%c0_6, %c0_7] : memref<128x128xbf16, #tpu.memory_space<vmem>>, vector<128x128xbf16>
    %cst_8 = arith.constant dense<0.000000e+00> : vector<96x128xf32>
    %11 = tpu.matmul %9, %10, %cst_8 {dimension_numbers = #tpu.dot_dimension_numbers<[1], [0], [0], [1], [0, 0, 1, 1], [], []>} : vector<96x128xbf16>, vector<128x128xbf16>, vector<96x128xf32> -> vector<96x128xf32>
    %c0_9 = arith.constant 0 : index
    %c0_10 = arith.constant 0 : index
    %12 = vector.load %arg5[%c0_9, %c0_10] : memref<1x128xf32, #tpu.memory_space<vmem>>, vector<1x128xf32>
    %13 = vector.broadcast %12 : vector<1x128xf32> to vector<96x128xf32>
    %14 = arith.addf %11, %13 : vector<96x128xf32>
    %cst_11 = arith.constant 0.000000e+00 : f32
    %15 = vector.broadcast %cst_11 : f32 to vector<96x128xf32>
    %16 = arith.maximumf %14, %15 : vector<96x128xf32>
    %17 = arith.truncf %16 : vector<96x128xf32> to vector<96x128xbf16>
    %c0_12 = arith.constant 0 : index
    %c0_13 = arith.constant 0 : index
    %18 = vector.load %arg6[%c0_12, %c0_13] : memref<128x128xbf16, #tpu.memory_space<vmem>>, vector<128x128xbf16>
    %cst_14 = arith.constant dense<0.000000e+00> : vector<96x128xf32>
    %19 = tpu.matmul %17, %18, %cst_14 {dimension_numbers = #tpu.dot_dimension_numbers<[1], [0], [0], [1], [0, 0, 1, 1], [], []>} : vector<96x128xbf16>, vector<128x128xbf16>, vector<96x128xf32> -> vector<96x128xf32>
    %c0_15 = arith.constant 0 : index
    %c0_16 = arith.constant 0 : index
    %20 = vector.load %arg7[%c0_15, %c0_16] : memref<1x128xf32, #tpu.memory_space<vmem>>, vector<1x128xf32>
    %21 = vector.broadcast %20 : vector<1x128xf32> to vector<96x128xf32>
    %22 = arith.addf %19, %21 : vector<96x128xf32>
    %cst_17 = arith.constant 3.000000e+00 : f32
    %23 = vector.broadcast %cst_17 : f32 to vector<96x128xf32>
    %24 = arith.addf %22, %23 : vector<96x128xf32>
    %cst_18 = arith.constant 0.000000e+00 : f32
    %cst_19 = arith.constant 6.000000e+00 : f32
    %25 = vector.broadcast %cst_18 : f32 to vector<96x128xf32>
    %26 = arith.maximumf %25, %24 : vector<96x128xf32>
    %27 = vector.broadcast %cst_19 : f32 to vector<96x128xf32>
    %28 = arith.minimumf %27, %26 : vector<96x128xf32>
    %29 = arith.mulf %22, %28 : vector<96x128xf32>
    %cst_20 = arith.constant 0.166666672 : f32
    %30 = vector.broadcast %cst_20 : f32 to vector<96x128xf32>
    %31 = arith.mulf %29, %30 : vector<96x128xf32>
    %c0_21 = arith.constant 0 : index
    %c0_22 = arith.constant 0 : index
    %32 = vector.load %arg8[%c0_21, %c0_22] : memref<1x128xf32, #tpu.memory_space<vmem>>, vector<1x128xf32>
    %33 = vector.broadcast %32 : vector<1x128xf32> to vector<96x128xf32>
    %34 = arith.mulf %31, %33 : vector<96x128xf32>
    %cst_23 = arith.constant dense<0.000000e+00> : vector<96xf32>
    %35 = vector.multi_reduction <add>, %34, %cst_23 [1] : vector<96x128xf32> to vector<96xf32>
    %36 = vector.shape_cast %35 : vector<96xf32> to vector<96x1xf32>
    %c0_24 = arith.constant 0 : index
    %c0_25 = arith.constant 0 : index
    %37 = vector.load %arg9[%c0_24, %c0_25] : memref<1x1xf32, #tpu.memory_space<vmem>>, vector<1x1xf32>
    %38 = vector.broadcast %37 : vector<1x1xf32> to vector<96x1xf32>
    %39 = arith.addf %36, %38 : vector<96x1xf32>
    %c0_26 = arith.constant 0 : index
    %c0_27 = arith.constant 0 : index
    %40 = vector.load %arg10[%c0_26, %c0_27] : memref<96x1xf32, #tpu.memory_space<vmem>>, vector<96x1xf32>
    tpu.vector_store %arg10[%c0_26, %c0_27], %39 {strides = array<i32>} : memref<96x1xf32, #tpu.memory_space<vmem>>, vector<96x1xf32>,
    return
  }
  func.func @transform_0(%arg0: i32) -> (i32, i32) {
    %c0_i32 = arith.constant 0 : i32
    %c0_i32_0 = arith.constant 0 : i32
    return %arg0, %c0_i32 : i32, i32
  }
  func.func @transform_1(%arg0: i32) -> (i32, i32) {
    %c0_i32 = arith.constant 0 : i32
    %c0_i32_0 = arith.constant 0 : i32
    %c0_i32_1 = arith.constant 0 : i32
    return %c0_i32, %c0_i32_0 : i32, i32
  }
  func.func @transform_2(%arg0: i32) -> (i32, i32) {
    %c0_i32 = arith.constant 0 : i32
    %c0_i32_0 = arith.constant 0 : i32
    %c0_i32_1 = arith.constant 0 : i32
    return %c0_i32, %c0_i32_0 : i32, i32
  }
  func.func @transform_3(%arg0: i32) -> (i32, i32) {
    %c0_i32 = arith.constant 0 : i32
    %c0_i32_0 = arith.constant 0 : i32
    %c0_i32_1 = arith.constant 0 : i32
    return %c0_i32, %c0_i32_0 : i32, i32
  }
  func.func @transform_4(%arg0: i32) -> (i32, i32) {
    %c0_i32 = arith.constant 0 : i32
    %c0_i32_0 = arith.constant 0 : i32
    %c0_i32_1 = arith.constant 0 : i32
    return %c0_i32, %c0_i32_0 : i32, i32
  }
  func.func @transform_5(%arg0: i32) -> (i32, i32) {
    %c0_i32 = arith.constant 0 : i32
    %c0_i32_0 = arith.constant 0 : i32
    %c0_i32_1 = arith.constant 0 : i32
    return %c0_i32, %c0_i32_0 : i32, i32
  }
  func.func @transform_6(%arg0: i32) -> (i32, i32) {
    %c0_i32 = arith.constant 0 : i32
    %c0_i32_0 = arith.constant 0 : i32
    %c0_i32_1 = arith.constant 0 : i32
    return %c0_i32, %c0_i32_0 : i32, i32
  }
  func.func @transform_7(%arg0: i32) -> (i32, i32) {
    %c0_i32 = arith.constant 0 : i32
    %c0_i32_0 = arith.constant 0 : i32
    %c0_i32_1 = arith.constant 0 : i32
    return %c0_i32, %c0_i32_0 : i32, i32
  }
  func.func @transform_8(%arg0: i32) -> (i32, i32) {
    %c0_i32 = arith.constant 0 : i32
    %c0_i32_0 = arith.constant 0 : i32
    %c0_i32_1 = arith.constant 0 : i32
    return %c0_i32, %c0_i32_0 : i32, i32
  }
  func.func @transform_9(%arg0: i32) -> (i32, i32) {
    %c0_i32 = arith.constant 0 : i32
    %c0_i32_0 = arith.constant 0 : i32
    return %arg0, %c0_i32 : i32, i32
  }
}

</mosaic_0001>

<llo_original>
// kernel: critic_ppo_forward.3
$region0: #{critic_ppo_forward.3}
  #allocation0 [shape = 'u32[]', space=smem, size = 0x4, offset = 0x4, fixed_abs, tag = 'smem constant byte address 0x4 - core index']
  #allocation1 [shape = 'u32[144,128]{1,0:T(1,128)}', space=vmem, size = 0x12000, scoped, tag = 'internal scratch']
  #allocation2 [shape = 'f32[1,1]{1,0:T(1,128)S(1)}', space=vmem, size = 0x200, scoped, tag = 'scoped memory for critic_ppo_forward.3']
  %s0 = inlined_call_operand.vmem [shape: f32[8,16], index: 0, kind: input, shape index: {}]
  %s1 = inlined_call_operand.vmem [shape: bf16[16,128], index: 1, kind: input, shape index: {}]
  %s2 = inlined_call_operand.vmem [shape: f32[1,128], index: 2, kind: input, shape index: {}]
  %s3 = inlined_call_operand.vmem [shape: bf16[128,128], index: 3, kind: input, shape index: {}]
  %s4 = inlined_call_operand.vmem [shape: f32[1,128], index: 4, kind: input, shape index: {}]
  %s5 = inlined_call_operand.vmem [shape: bf16[128,128], index: 5, kind: input, shape index: {}]
  %s6 = inlined_call_operand.vmem [shape: f32[1,128], index: 6, kind: input, shape index: {}]
  %s7 = inlined_call_operand.vmem [shape: f32[1,128], index: 7, kind: input, shape index: {}]
  %s8 = inlined_call_operand.<no memory space> [shape: f32[1,1], index: 8, kind: input, shape index: {}]
  %s9 = inlined_call_operand.vmem [shape: f32[8,1], index: 9, kind: output, shape index: {}]
  %s10 = sld [smem:[#allocation0]]
  $region46: #{critic_ppo_forward.3} parent=0
    _
  %s12 = ssub.s32 1, %s10
  %s13 = scalar_select 0, %s12, %s10
  %v14 = vstv %s8
  %15 = vst [vmem:[#allocation2] sm:$0x1] %v14
  // Predicated region
  $region2: #{critic_ppo_forward.3} parent=0 // pred_check
    _
  $region3: #{critic_ppo_forward.3} parent=0 // pred_check_branch
    %17 = sbr.rel (0) target = $region5
  $region4: #{critic_ppo_forward.3} parent=0 // pred_region
    _
  $region5: #{critic_ppo_forward.3} parent=0 // pred_fallthru
    _
  // Predicated region
  $region6: #{critic_ppo_forward.3} parent=0 // pred_check
    _
  $region7: #{critic_ppo_forward.3} parent=0 // pred_check_branch
    %19 = sbr.rel (0) target = $region9
  $region8: #{critic_ppo_forward.3} parent=0 // pred_region
    _
  $region9: #{critic_ppo_forward.3} parent=0 // pred_fallthru
    _
  // Predicated region
  $region10: #{critic_ppo_forward.3} parent=0 // pred_check
    _
  $region11: #{critic_ppo_forward.3} parent=0 // pred_check_branch
    %21 = sbr.rel (0) target = $region13
  $region12: #{critic_ppo_forward.3} parent=0 // pred_region
    _
  $region13: #{critic_ppo_forward.3} parent=0 // pred_fallthru
    _
  // Predicated region
  $region14: #{critic_ppo_forward.3} parent=0 // pred_check
    _
  $region15: #{critic_ppo_forward.3} parent=0 // pred_check_branch
    %23 = sbr.rel (0) target = $region17
  $region16: #{critic_ppo_forward.3} parent=0 // pred_region
    _
  $region17: #{critic_ppo_forward.3} parent=0 // pred_fallthru
    _
  // Predicated region
  $region18: #{critic_ppo_forward.3} parent=0 // pred_check
    _
  $region19: #{critic_ppo_forward.3} parent=0 // pred_check_branch
    %25 = sbr.rel (0) target = $region21
  $region20: #{critic_ppo_forward.3} parent=0 // pred_region
    _
  $region21: #{critic_ppo_forward.3} parent=0 // pred_fallthru
    _
  // Predicated region
  $region22: #{critic_ppo_forward.3} parent=0 // pred_check
    _
  $region23: #{critic_ppo_forward.3} parent=0 // pred_check_branch
    %27 = sbr.rel (0) target = $region25
  $region24: #{critic_ppo_forward.3} parent=0 // pred_region
    _
  $region25: #{critic_ppo_forward.3} parent=0 // pred_fallthru
    _
  // Predicated region
  $region26: #{critic_ppo_forward.3} parent=0 // pred_check
    _
  $region27: #{critic_ppo_forward.3} parent=0 // pred_check_branch
    %29 = sbr.rel (0) target = $region29
  $region28: #{critic_ppo_forward.3} parent=0 // pred_region
    _
  $region29: #{critic_ppo_forward.3} parent=0 // pred_fallthru
    _
  // Predicated region
  $region30: #{critic_ppo_forward.3} parent=0 // pred_check
    _
  $region31: #{critic_ppo_forward.3} parent=0 // pred_check_branch
    %31 = sbr.rel (0) target = $region33
  $region32: #{critic_ppo_forward.3} parent=0 // pred_region
    _
  $region33: #{critic_ppo_forward.3} parent=0 // pred_fallthru
    _
  // Predicated region
  $region34: #{critic_ppo_forward.3} parent=0 // pred_check
    _
  $region35: #{critic_ppo_forward.3} parent=0 // pred_check_branch
    %33 = sbr.rel (0) target = $region37
  $region36: #{critic_ppo_forward.3} parent=0 // pred_region
    _
  $region37: #{critic_ppo_forward.3} parent=0 // pred_fallthru
    _
  %v35 = vld [vmem:[%s0] sm:$0xff]
  %v36 = vpack.c.bf16 %v35, %v35
  %v37 = vld [vmem:[%s1] sm:$0xf]
  %v38 = vld [vmem:[%s1 + $0x4] sm:$0xf]
  %v39 = vld [vmem:[%s2] sm:$0x1]
  %v41 = vlaneseq
  %v42 = vshrl.u32 %v41, 7
  %v43 = vsub.s32 0, %v42
  %v44 = vrot.slane %v39, %v43
  %v48 = vunpack.c.l.b16 %v37
  %v49 = vunpack.c.l.b16 %v38
  %v50 = vpack.c.b16 %v49, %v48
  %vm52 = vcmask 130048
  %v54 = vsel %vm52, %v36, 0
  %56 = vmatprep.subr.bf16.mxu0 0
  %57 = vmatpush1.bf16.msra.mxu0 %v50
  %58 = vmatprep.subr.bf16.mxu0 0
  %59 = vmatpush1.bf16.msra.mxu0 0
  %60 = vmatprep.subr.bf16.mxu0 0
  %61 = vmatpush1.bf16.msra.mxu0 0
  %62 = vmatprep.subr.bf16.mxu0 0
  %63 = vmatpush1.bf16.msra.mxu0 0
  %64 = vmatprep.subr.bf16.mxu0 0
  %65 = vmatpush1.bf16.msra.mxu0 0
  %66 = vmatprep.subr.bf16.mxu0 0
  %67 = vmatpush1.bf16.msra.mxu0 0
  %68 = vmatprep.subr.bf16.mxu0 0
  %69 = vmatpush1.bf16.msra.mxu0 0
  %70 = vmatprep.subr.bf16.mxu0 0
  %71 = vmatpush1.bf16.msra.mxu0 0
  %72 = vmatprep.subr.bf16.mxu0 0
  %73 = vmatpush1.bf16.msra.mxu0 0
  %74 = vmatprep.subr.bf16.mxu0 0
  %75 = vmatpush1.bf16.msra.mxu0 0
  %76 = vmatprep.subr.bf16.mxu0 0
  %77 = vmatpush1.bf16.msra.mxu0 0
  %78 = vmatprep.subr.bf16.mxu0 0
  %79 = vmatpush1.bf16.msra.mxu0 0
  %80 = vmatprep.subr.bf16.mxu0 0
  %81 = vmatpush1.bf16.msra.mxu0 0
  %82 = vmatprep.subr.bf16.mxu0 0
  %83 = vmatpush1.bf16.msra.mxu0 0
  %84 = vmatprep.subr.bf16.mxu0 0
  %85 = vmatpush1.bf16.msra.mxu0 0
  %86 = vmatprep.subr.bf16.mxu0 0
  %87 = vmatpush1.bf16.msra.mxu0 0
  %88 = vmatprep.mubr.bf16.mxu0 0
  %89 = vmatmul.mubr.bf16.gmra.mrb[0].mxu0 %v54
  %v90 = vpop.f32.mrb[0].mxu0
  %v91 = vadd.f32 %v44, %v90
  %v92 = vpop.f32.mrb[0].mxu0
  %v93 = vpop.f32.mrb[0].mxu0
  %v94 = vpop.f32.mrb[0].mxu0
  %95 = vdwg.mxu0
  %v96 = vmax.f32 %v91, 0.0
  %v97 = vpack.c.bf16 %v96, %v96
  %v98 = vld [vmem:[%s3] sm:$0xf]
  %v99 = vld [vmem:[%s3 + $0x4] sm:$0xf]
  %v100 = vld [vmem:[%s3 + $0x8] sm:$0xf]
  %v101 = vld [vmem:[%s3 + $0xc] sm:$0xf]
  %v102 = vld [vmem:[%s3 + $0x10] sm:$0xf]
  %v103 = vld [vmem:[%s3 + $0x14] sm:$0xf]
  %v104 = vld [vmem:[%s3 + $0x18] sm:$0xf]
  %v105 = vld [vmem:[%s3 + $0x1c] sm:$0xf]
  %v106 = vld [vmem:[%s3 + $0x20] sm:$0xf]
  %v107 = vld [vmem:[%s3 + $0x24] sm:$0xf]
  %v108 = vld [vmem:[%s3 + $0x28] sm:$0xf]
  %v109 = vld [vmem:[%s3 + $0x2c] sm:$0xf]
  %v110 = vld [vmem:[%s3 + $0x30] sm:$0xf]
  %v111 = vld [vmem:[%s3 + $0x34] sm:$0xf]
  %v112 = vld [vmem:[%s3 + $0x38] sm:$0xf]
  %v113 = vld [vmem:[%s3 + $0x3c] sm:$0xf]
  %v114 = vld [vmem:[%s4] sm:$0x1]
  %v116 = vlaneseq
  %v117 = vshrl.u32 %v116, 7
  %v118 = vsub.s32 0, %v117
  %v119 = vrot.slane %v114, %v118
  %v137 = vunpack.c.l.b16 %v98
  %v138 = vunpack.c.l.b16 %v99
  %v139 = vunpack.c.l.b16 %v100
  %v140 = vunpack.c.l.b16 %v101
  %v141 = vunpack.c.l.b16 %v102
  %v142 = vunpack.c.l.b16 %v103
  %v143 = vunpack.c.l.b16 %v104
  %v144 = vunpack.c.l.b16 %v105
  %v145 = vunpack.c.l.b16 %v106
  %v146 = vunpack.c.l.b16 %v107
  %v147 = vunpack.c.l.b16 %v108
  %v148 = vunpack.c.l.b16 %v109
  %v149 = vunpack.c.l.b16 %v110
  %v150 = vunpack.c.l.b16 %v111
  %v151 = vunpack.c.l.b16 %v112
  %v152 = vunpack.c.l.b16 %v113
  %v153 = vpack.c.b16 %v138, %v137
  %v154 = vpack.c.b16 %v140, %v139
  %v155 = vpack.c.b16 %v142, %v141
  %v156 = vpack.c.b16 %v144, %v143
  %v157 = vpack.c.b16 %v146, %v145
  %v158 = vpack.c.b16 %v148, %v147
  %v159 = vpack.c.b16 %v150, %v149
  %v160 = vpack.c.b16 %v152, %v151
  %169 = vmatprep.subr.bf16.mxu0 0
  %170 = vmatpush1.bf16.msra.mxu0 %v153
  %171 = vmatprep.subr.bf16.mxu0 0
  %172 = vmatpush1.bf16.msra.mxu0 %v154
  %173 = vmatprep.subr.bf16.mxu0 0
  %174 = vmatpush1.bf16.msra.mxu0 %v155
  %175 = vmatprep.subr.bf16.mxu0 0
  %176 = vmatpush1.bf16.msra.mxu0 %v156
  %177 = vmatprep.subr.bf16.mxu0 0
  %178 = vmatpush1.bf16.msra.mxu0 %v157
  %179 = vmatprep.subr.bf16.mxu0 0
  %180 = vmatpush1.bf16.msra.mxu0 %v158
  %181 = vmatprep.subr.bf16.mxu0 0
  %182 = vmatpush1.bf16.msra.mxu0 %v159
  %183 = vmatprep.subr.bf16.mxu0 0
  %184 = vmatpush1.bf16.msra.mxu0 %v160
  %185 = vmatprep.subr.bf16.mxu0 0
  %186 = vmatpush1.bf16.msra.mxu0 0
  %187 = vmatprep.subr.bf16.mxu0 0
  %188 = vmatpush1.bf16.msra.mxu0 0
  %189 = vmatprep.subr.bf16.mxu0 0
  %190 = vmatpush1.bf16.msra.mxu0 0
  %191 = vmatprep.subr.bf16.mxu0 0
  %192 = vmatpush1.bf16.msra.mxu0 0
  %193 = vmatprep.subr.bf16.mxu0 0
  %194 = vmatpush1.bf16.msra.mxu0 0
  %195 = vmatprep.subr.bf16.mxu0 0
  %196 = vmatpush1.bf16.msra.mxu0 0
  %197 = vmatprep.subr.bf16.mxu0 0
  %198 = vmatpush1.bf16.msra.mxu0 0
  %199 = vmatprep.subr.bf16.mxu0 0
  %200 = vmatpush1.bf16.msra.mxu0 0
  %201 = vmatprep.mubr.bf16.mxu0 0
  %202 = vmatmul.mubr.bf16.gmra.mrb[0].mxu0 %v97
  %v203 = vpop.f32.mrb[0].mxu0
  %v204 = vadd.f32 %v119, %v203
  %v205 = vpop.f32.mrb[0].mxu0
  %v206 = vpop.f32.mrb[0].mxu0
  %v207 = vpop.f32.mrb[0].mxu0
  %208 = vdwg.mxu0
  %v209 = vmax.f32 %v204, 0.0
  %v210 = vpack.c.bf16 %v209, %v209
  %v211 = vld [vmem:[%s5] sm:$0xf]
  %v212 = vld [vmem:[%s5 + $0x4] sm:$0xf]
  %v213 = vld [vmem:[%s5 + $0x8] sm:$0xf]
  %v214 = vld [vmem:[%s5 + $0xc] sm:$0xf]
  %v215 = vld [vmem:[%s5 + $0x10] sm:$0xf]
  %v216 = vld [vmem:[%s5 + $0x14] sm:$0xf]
  %v217 = vld [vmem:[%s5 + $0x18] sm:$0xf]
  %v218 = vld [vmem:[%s5 + $0x1c] sm:$0xf]
  %v219 = vld [vmem:[%s5 + $0x20] sm:$0xf]
  %v220 = vld [vmem:[%s5 + $0x24] sm:$0xf]
  %v221 = vld [vmem:[%s5 + $0x28] sm:$0xf]
  %v222 = vld [vmem:[%s5 + $0x2c] sm:$0xf]
  %v223 = vld [vmem:[%s5 + $0x30] sm:$0xf]
  %v224 = vld [vmem:[%s5 + $0x34] sm:$0xf]
  %v225 = vld [vmem:[%s5 + $0x38] sm:$0xf]
  %v226 = vld [vmem:[%s5 + $0x3c] sm:$0xf]
  %v227 = vld [vmem:[%s6] sm:$0x1]
  %v229 = vlaneseq
  %v230 = vshrl.u32 %v229, 7
  %v231 = vsub.s32 0, %v230
  %v232 = vrot.slane %v227, %v231
  %v250 = vunpack.c.l.b16 %v211
  %v251 = vunpack.c.l.b16 %v212
  %v252 = vunpack.c.l.b16 %v213
  %v253 = vunpack.c.l.b16 %v214
  %v254 = vunpack.c.l.b16 %v215
  %v255 = vunpack.c.l.b16 %v216
  %v256 = vunpack.c.l.b16 %v217
  %v257 = vunpack.c.l.b16 %v218
  %v258 = vunpack.c.l.b16 %v219
  %v259 = vunpack.c.l.b16 %v220
  %v260 = vunpack.c.l.b16 %v221
  %v261 = vunpack.c.l.b16 %v222
  %v262 = vunpack.c.l.b16 %v223
  %v263 = vunpack.c.l.b16 %v224
  %v264 = vunpack.c.l.b16 %v225
  %v265 = vunpack.c.l.b16 %v226
  %v266 = vpack.c.b16 %v251, %v250
  %v267 = vpack.c.b16 %v253, %v252
  %v268 = vpack.c.b16 %v255, %v254
  %v269 = vpack.c.b16 %v257, %v256
  %v270 = vpack.c.b16 %v259, %v258
  %v271 = vpack.c.b16 %v261, %v260
  %v272 = vpack.c.b16 %v263, %v262
  %v273 = vpack.c.b16 %v265, %v264
  %282 = vmatprep.subr.bf16.mxu0 0
  %283 = vmatpush1.bf16.msra.mxu0 %v266
  %284 = vmatprep.subr.bf16.mxu0 0
  %285 = vmatpush1.bf16.msra.mxu0 %v267
  %286 = vmatprep.subr.bf16.mxu0 0
  %287 = vmatpush1.bf16.msra.mxu0 %v268
  %288 = vmatprep.subr.bf16.mxu0 0
  %289 = vmatpush1.bf16.msra.mxu0 %v269
  %290 = vmatprep.subr.bf16.mxu0 0
  %291 = vmatpush1.bf16.msra.mxu0 %v270
  %292 = vmatprep.subr.bf16.mxu0 0
  %293 = vmatpush1.bf16.msra.mxu0 %v271
  %294 = vmatprep.subr.bf16.mxu0 0
  %295 = vmatpush1.bf16.msra.mxu0 %v272
  %296 = vmatprep.subr.bf16.mxu0 0
  %297 = vmatpush1.bf16.msra.mxu0 %v273
  %298 = vmatprep.subr.bf16.mxu0 0
  %299 = vmatpush1.bf16.msra.mxu0 0
  %300 = vmatprep.subr.bf16.mxu0 0
  %301 = vmatpush1.bf16.msra.mxu0 0
  %302 = vmatprep.subr.bf16.mxu0 0
  %303 = vmatpush1.bf16.msra.mxu0 0
  %304 = vmatprep.subr.bf16.mxu0 0
  %305 = vmatpush1.bf16.msra.mxu0 0
  %306 = vmatprep.subr.bf16.mxu0 0
  %307 = vmatpush1.bf16.msra.mxu0 0
  %308 = vmatprep.subr.bf16.mxu0 0
  %309 = vmatpush1.bf16.msra.mxu0 0
  %310 = vmatprep.subr.bf16.mxu0 0
  %311 = vmatpush1.bf16.msra.mxu0 0
  %312 = vmatprep.subr.bf16.mxu0 0
  %313 = vmatpush1.bf16.msra.mxu0 0
  %314 = vmatprep.mubr.bf16.mxu0 0
  %315 = vmatmul.mubr.bf16.gmra.mrb[0].mxu0 %v210
  %v316 = vpop.f32.mrb[0].mxu0
  %v317 = vadd.f32 %v232, %v316
  %v318 = vpop.f32.mrb[0].mxu0
  %v319 = vpop.f32.mrb[0].mxu0
  %v320 = vpop.f32.mrb[0].mxu0
  %321 = vdwg.mxu0
  %v322 = vadd.f32 %v317, 3.0
  %v323 = vmax.f32 %v322, 0.0
  %v324 = vmin.f32 %v323, 6.0
  %v325 = vmul.f32 %v317, %v324
  %v326 = vmul.f32 %v325, 0.16666667
  %v327 = vld [vmem:[%s7] sm:$0x1]
  %v329 = vlaneseq
  %v330 = vshrl.u32 %v329, 7
  %v331 = vsub.s32 0, %v330
  %v332 = vrot.slane %v327, %v331
  %v334 = vmul.f32 %v326, %v332
  %335 = vadd.xlane.f32.xlu0 %v334
  %v336 = vpop.xlane.xlu0 %335
  %v337 = vld [vmem:[#allocation2] sm:$0x1]
  %v339 = vlaneseq
  %v340 = vshrl.u32 %v339, 7
  %v341 = vsub.s32 0, %v340
  %v342 = vrot.slane %v337, %v341
  %v344 = vadd.f32 %v336, %v342
  %vm345 = vcmask 7168
  %346 = vst.msk [vmem:[%s9] sm:$0xff] %vm345, %v344
  // Predicated region
  $region38: #{critic_ppo_forward.3} parent=0 // pred_check
    _
  $region39: #{critic_ppo_forward.3} parent=0 // pred_check_branch
    %348 = sbr.rel (0) target = $region41
  $region40: #{critic_ppo_forward.3} parent=0 // pred_region
    _
  $region41: #{critic_ppo_forward.3} parent=0 // pred_fallthru
    _
  // Predicated region
  $region42: #{critic_ppo_forward.3} parent=0 // pred_check
    _
  $region43: #{critic_ppo_forward.3} parent=0 // pred_check_branch
    %350 = sbr.rel (0) target = $region45
  $region44: #{critic_ppo_forward.3} parent=0 // pred_region
    _
  $region45: #{critic_ppo_forward.3} parent=0 // pred_fallthru
    _

// kernel: critic_ppo_forward.2
$region0: #{critic_ppo_forward.2}
  #allocation0 [shape = 'u32[]', space=smem, size = 0x4, offset = 0x4, fixed_abs, tag = 'smem constant byte address 0x4 - core index']
  #allocation1 [shape = 'u32[144,128]{1,0:T(1,128)}', space=vmem, size = 0x12000, scoped, tag = 'internal scratch']
  #allocation2 [shape = 'f32[1,1]{1,0:T(1,128)S(1)}', space=vmem, size = 0x200, scoped, tag = 'scoped memory for critic_ppo_forward.2']
  %s0 = inlined_call_operand.vmem [shape: f32[200,16], index: 0, kind: input, shape index: {}]
  %s1 = inlined_call_operand.vmem [shape: bf16[16,128], index: 1, kind: input, shape index: {}]
  %s2 = inlined_call_operand.vmem [shape: f32[1,128], index: 2, kind: input, shape index: {}]
  %s3 = inlined_call_operand.vmem [shape: bf16[128,128], index: 3, kind: input, shape index: {}]
  %s4 = inlined_call_operand.vmem [shape: f32[1,128], index: 4, kind: input, shape index: {}]
  %s5 = inlined_call_operand.vmem [shape: bf16[128,128], index: 5, kind: input, shape index: {}]
  %s6 = inlined_call_operand.vmem [shape: f32[1,128], index: 6, kind: input, shape index: {}]
  %s7 = inlined_call_operand.vmem [shape: f32[1,128], index: 7, kind: input, shape index: {}]
  %s8 = inlined_call_operand.<no memory space> [shape: f32[1,1], index: 8, kind: input, shape index: {}]
  %s9 = inlined_call_operand.vmem [shape: f32[192,1], index: 9, kind: output, shape index: {}]
  %s10 = sld [smem:[#allocation0]]
  $region69: #{critic_ppo_forward.2} parent=0
    _
  %s12 = ssub.s32 1, %s10
  %s13 = scalar_select 0, %s12, %s10
  %v14 = vstv %s8
  %15 = vst [vmem:[#allocation2] sm:$0x1] %v14
  loop: start=0, step=1, limit=4
  $region2: #{critic_ppo_forward.2} parent=0 // loop_pre_header
    _
  $region3: #{critic_ppo_forward.2} parent=0 // loop_header
    %s17 = sphi 0, %s21
    %p18 = scmp.ge.s32.totalorder %s17, 4
    %s27 = sphi 0, %s29
    %s30 = sphi 0, %s27
    %s31 = sphi 0, %s30
    %s47 = sphi 0, %s31
    %s51 = sphi 0, %s51
    %s53 = sphi 0, %s51
    %s54 = sphi 0, %s53
    %s68 = sphi 0, %s54
    %s72 = sphi 0, %s72
    %s74 = sphi 0, %s72
    %s75 = sphi 0, %s74
    %s89 = sphi 0, %s75
    %s93 = sphi 0, %s93
    %s95 = sphi 0, %s93
    %s96 = sphi 0, %s95
    %s110 = sphi 0, %s96
    %s114 = sphi 0, %s114
    %s116 = sphi 0, %s114
    %s117 = sphi 0, %s116
    %s131 = sphi 0, %s117
    %s135 = sphi 0, %s135
    %s137 = sphi 0, %s135
    %s138 = sphi 0, %s137
    %s152 = sphi 0, %s138
    %s156 = sphi 0, %s156
    %s158 = sphi 0, %s156
    %s159 = sphi 0, %s158
    %s173 = sphi 0, %s159
    %s177 = sphi 0, %s177
    %s179 = sphi 0, %s177
    %s180 = sphi 0, %s179
    %s194 = sphi 0, %s180
    %s198 = sphi 0, %s198
    %s200 = sphi 0, %s198
    %s201 = sphi 0, %s200
    %s215 = sphi 0, %s201
    %s221 = sphi 0, %s223
    %s224 = sphi 0, %s221
    %s225 = sphi 0, %s224
    %s241 = sphi 0, %s225
  $region4: #{critic_ppo_forward.2} parent=0 // loop_header_branch
    %20 = sbr.rel (%p18) target = $region8
  $region5: #{critic_ppo_forward.2} parent=0 // loop_body
    %s22 = ssub.s32 %s17, 1
    %s23 = ssub.s32 %s17, 2
    %s24 = sadd.s32 %s17, 1
    %s25 = ssub.s32 %s17, %s24
    %p26 = scmp.eq.s32.totalorder %s25, 0
    %s28 = sadd.s32 %s27, 1
    %s29 = scalar_select %p26, %s27, %s28
    %p32 = pneg %p26
    %p33 = scmp.eq.s32.totalorder %s17, 1
    %p34 = por %p32, %p33
    %p35 = scmp.ne.s32.totalorder %s27, %s30
    %p36 = scmp.eq.s32.totalorder %s17, 0
    %p37 = por %p35, %p36
    %p38 = scmp.ne.s32.totalorder %s27, %s30
    %p39 = scmp.eq.s32.totalorder %s22, 1
    %p40 = por %p38, %p39
    %p41 = scmp.ne.s32.totalorder %s30, %s31
    %p42 = scmp.eq.s32.totalorder %s22, 0
    %p43 = por %p41, %p42
    %p44 = scmp.ne.s32.totalorder %s30, %s31
    %p45 = scmp.eq.s32.totalorder %s23, 1
    %p46 = por %p44, %p45
    %p48 = scmp.ne.s32.totalorder %s31, %s47
    %p49 = scmp.eq.s32.totalorder %s23, 0
    %p50 = por %p48, %p49
    %s52 = sadd.s32 %s51, 1
    %p55 = scmp.eq.s32.totalorder %s17, 1
    %p56 = scmp.ne.s32.totalorder %s51, %s53
    %p57 = scmp.eq.s32.totalorder %s17, 0
    %p58 = por %p56, %p57
    %p59 = scmp.ne.s32.totalorder %s51, %s53
    %p60 = scmp.eq.s32.totalorder %s22, 1
    %p61 = por %p59, %p60
    %p62 = scmp.ne.s32.totalorder %s53, %s54
    %p63 = scmp.eq.s32.totalorder %s22, 0
    %p64 = por %p62, %p63
    %p65 = scmp.ne.s32.totalorder %s53, %s54
    %p66 = scmp.eq.s32.totalorder %s23, 1
    %p67 = por %p65, %p66
    %p69 = scmp.ne.s32.totalorder %s54, %s68
    %p70 = scmp.eq.s32.totalorder %s23, 0
    %p71 = por %p69, %p70
    %s73 = sadd.s32 %s72, 1
    %p76 = scmp.eq.s32.totalorder %s17, 1
    %p77 = scmp.ne.s32.totalorder %s72, %s74
    %p78 = scmp.eq.s32.totalorder %s17, 0
    %p79 = por %p77, %p78
    %p80 = scmp.ne.s32.totalorder %s72, %s74
    %p81 = scmp.eq.s32.totalorder %s22, 1
    %p82 = por %p80, %p81
    %p83 = scmp.ne.s32.totalorder %s74, %s75
    %p84 = scmp.eq.s32.totalorder %s22, 0
    %p85 = por %p83, %p84
    %p86 = scmp.ne.s32.totalorder %s74, %s75
    %p87 = scmp.eq.s32.totalorder %s23, 1
    %p88 = por %p86, %p87
    %p90 = scmp.ne.s32.totalorder %s75, %s89
    %p91 = scmp.eq.s32.totalorder %s23, 0
    %p92 = por %p90, %p91
    %s94 = sadd.s32 %s93, 1
    %p97 = scmp.eq.s32.totalorder %s17, 1
    %p98 = scmp.ne.s32.totalorder %s93, %s95
    %p99 = scmp.eq.s32.totalorder %s17, 0
    %p100 = por %p98, %p99
    %p101 = scmp.ne.s32.totalorder %s93, %s95
    %p102 = scmp.eq.s32.totalorder %s22, 1
    %p103 = por %p101, %p102
    %p104 = scmp.ne.s32.totalorder %s95, %s96
    %p105 = scmp.eq.s32.totalorder %s22, 0
    %p106 = por %p104, %p105
    %p107 = scmp.ne.s32.totalorder %s95, %s96
    %p108 = scmp.eq.s32.totalorder %s23, 1
    %p109 = por %p107, %p108
    %p111 = scmp.ne.s32.totalorder %s96, %s110
    %p112 = scmp.eq.s32.totalorder %s23, 0
    %p113 = por %p111, %p112
    %s115 = sadd.s32 %s114, 1
    %p118 = scmp.eq.s32.totalorder %s17, 1
    %p119 = scmp.ne.s32.totalorder %s114, %s116
    %p120 = scmp.eq.s32.totalorder %s17, 0
    %p121 = por %p119, %p120
    %p122 = scmp.ne.s32.totalorder %s114, %s116
    %p123 = scmp.eq.s32.totalorder %s22, 1
    %p124 = por %p122, %p123
    %p125 = scmp.ne.s32.totalorder %s116, %s117
    %p126 = scmp.eq.s32.totalorder %s22, 0
    %p127 = por %p125, %p126
    %p128 = scmp.ne.s32.totalorder %s116, %s117
    %p129 = scmp.eq.s32.totalorder %s23, 1
    %p130 = por %p128, %p129
    %p132 = scmp.ne.s32.totalorder %s117, %s131
    %p133 = scmp.eq.s32.totalorder %s23, 0
    %p134 = por %p132, %p133
    %s136 = sadd.s32 %s135, 1
    %p139 = scmp.eq.s32.totalorder %s17, 1
    %p140 = scmp.ne.s32.totalorder %s135, %s137
    %p141 = scmp.eq.s32.totalorder %s17, 0
    %p142 = por %p140, %p141
    %p143 = scmp.ne.s32.totalorder %s135, %s137
    %p144 = scmp.eq.s32.totalorder %s22, 1
    %p145 = por %p143, %p144
    %p146 = scmp.ne.s32.totalorder %s137, %s138
    %p147 = scmp.eq.s32.totalorder %s22, 0
    %p148 = por %p146, %p147
    %p149 = scmp.ne.s32.totalorder %s137, %s138
    %p150 = scmp.eq.s32.totalorder %s23, 1
    %p151 = por %p149, %p150
    %p153 = scmp.ne.s32.totalorder %s138, %s152
    %p154 = scmp.eq.s32.totalorder %s23, 0
    %p155 = por %p153, %p154
    %s157 = sadd.s32 %s156, 1
    %p160 = scmp.eq.s32.totalorder %s17, 1
    %p161 = scmp.ne.s32.totalorder %s156, %s158
    %p162 = scmp.eq.s32.totalorder %s17, 0
    %p163 = por %p161, %p162
    %p164 = scmp.ne.s32.totalorder %s156, %s158
    %p165 = scmp.eq.s32.totalorder %s22, 1
    %p166 = por %p164, %p165
    %p167 = scmp.ne.s32.totalorder %s158, %s159
    %p168 = scmp.eq.s32.totalorder %s22, 0
    %p169 = por %p167, %p168
    %p170 = scmp.ne.s32.totalorder %s158, %s159
    %p171 = scmp.eq.s32.totalorder %s23, 1
    %p172 = por %p170, %p171
    %p174 = scmp.ne.s32.totalorder %s159, %s173
    %p175 = scmp.eq.s32.totalorder %s23, 0
    %p176 = por %p174, %p175
    %s178 = sadd.s32 %s177, 1
    %p181 = scmp.eq.s32.totalorder %s17, 1
    %p182 = scmp.ne.s32.totalorder %s177, %s179
    %p183 = scmp.eq.s32.totalorder %s17, 0
    %p184 = por %p182, %p183
    %p185 = scmp.ne.s32.totalorder %s177, %s179
    %p186 = scmp.eq.s32.totalorder %s22, 1
    %p187 = por %p185, %p186
    %p188 = scmp.ne.s32.totalorder %s179, %s180
    %p189 = scmp.eq.s32.totalorder %s22, 0
    %p190 = por %p188, %p189
    %p191 = scmp.ne.s32.totalorder %s179, %s180
    %p192 = scmp.eq.s32.totalorder %s23, 1
    %p193 = por %p191, %p192
    %p195 = scmp.ne.s32.totalorder %s180, %s194
    %p196 = scmp.eq.s32.totalorder %s23, 0
    %p197 = por %p195, %p196
    %s199 = sadd.s32 %s198, 1
    %p202 = scmp.eq.s32.totalorder %s17, 1
    %p203 = scmp.ne.s32.totalorder %s198, %s200
    %p204 = scmp.eq.s32.totalorder %s17, 0
    %p205 = por %p203, %p204
    %p206 = scmp.ne.s32.totalorder %s198, %s200
    %p207 = scmp.eq.s32.totalorder %s22, 1
    %p208 = por %p206, %p207
    %p209 = scmp.ne.s32.totalorder %s200, %s201
    %p210 = scmp.eq.s32.totalorder %s22, 0
    %p211 = por %p209, %p210
    %p212 = scmp.ne.s32.totalorder %s200, %s201
    %p213 = scmp.eq.s32.totalorder %s23, 1
    %p214 = por %p212, %p213
    %p216 = scmp.ne.s32.totalorder %s201, %s215
    %p217 = scmp.eq.s32.totalorder %s23, 0
    %p218 = por %p216, %p217
    %s219 = ssub.s32 %s17, %s24
    %p220 = scmp.eq.s32.totalorder %s219, 0
    %s222 = sadd.s32 %s221, 1
    %s223 = scalar_select %p220, %s221, %s222
    %p226 = pneg %p220
    %p227 = scmp.eq.s32.totalorder %s17, 1
    %p228 = por %p226, %p227
    %p229 = scmp.ne.s32.totalorder %s221, %s224
    %p230 = scmp.eq.s32.totalorder %s17, 0
    %p231 = por %p229, %p230
    %p232 = scmp.ne.s32.totalorder %s221, %s224
    %p233 = scmp.eq.s32.totalorder %s22, 1
    %p234 = por %p232, %p233
    %p235 = scmp.ne.s32.totalorder %s224, %s225
    %p236 = scmp.eq.s32.totalorder %s22, 0
    %p237 = por %p235, %p236
    %p238 = scmp.ne.s32.totalorder %s224, %s225
    %p239 = scmp.eq.s32.totalorder %s23, 1
    %p240 = por %p238, %p239
    %p242 = scmp.ne.s32.totalorder %s225, %s241
    %p243 = scmp.eq.s32.totalorder %s23, 0
    %p244 = por %p242, %p243
    %p245 = scmp.le.s32.totalorder 1, %s17
    %p246 = scmp.lt.s32.totalorder %s17, 3
    %p247 = pnand %p245, %p246
    %p248 = pneg %p247
    // Predicated region
    $region9: #{critic_ppo_forward.2} parent=5 // pred_check
      _
    $region10: #{critic_ppo_forward.2} parent=5 // pred_check_branch
      %250 = sbr.rel (%p247) target = $region12
    $region11: #{critic_ppo_forward.2} parent=5 // pred_region
      %s251 = ssub.s32 %s17, 1
      // Predicated region
      $region13: #{critic_ppo_forward.2} parent=11 // pred_check
        %p252 = pneg %p64
      $region14: #{critic_ppo_forward.2} parent=11 // pred_check_branch
        %254 = sbr.rel (%p252) target = $region16
      $region15: #{critic_ppo_forward.2} parent=11 // pred_region
        _
      $region16: #{critic_ppo_forward.2} parent=11 // pred_fallthru
        _
      // Predicated region
      $region17: #{critic_ppo_forward.2} parent=11 // pred_check
        %p255 = pneg %p85
      $region18: #{critic_ppo_forward.2} parent=11 // pred_check_branch
        %257 = sbr.rel (%p255) target = $region20
      $region19: #{critic_ppo_forward.2} parent=11 // pred_region
        _
      $region20: #{critic_ppo_forward.2} parent=11 // pred_fallthru
        _
      // Predicated region
      $region21: #{critic_ppo_forward.2} parent=11 // pred_check
        %p258 = pneg %p106
      $region22: #{critic_ppo_forward.2} parent=11 // pred_check_branch
        %260 = sbr.rel (%p258) target = $region24
      $region23: #{critic_ppo_forward.2} parent=11 // pred_region
        _
      $region24: #{critic_ppo_forward.2} parent=11 // pred_fallthru
        _
      // Predicated region
      $region25: #{critic_ppo_forward.2} parent=11 // pred_check
        %p261 = pneg %p127
      $region26: #{critic_ppo_forward.2} parent=11 // pred_check_branch
        %263 = sbr.rel (%p261) target = $region28
      $region27: #{critic_ppo_forward.2} parent=11 // pred_region
        _
      $region28: #{critic_ppo_forward.2} parent=11 // pred_fallthru
        _
      // Predicated region
      $region29: #{critic_ppo_forward.2} parent=11 // pred_check
        %p264 = pneg %p148
      $region30: #{critic_ppo_forward.2} parent=11 // pred_check_branch
        %266 = sbr.rel (%p264) target = $region32
      $region31: #{critic_ppo_forward.2} parent=11 // pred_region
        _
      $region32: #{critic_ppo_forward.2} parent=11 // pred_fallthru
        _
      // Predicated region
      $region33: #{critic_ppo_forward.2} parent=11 // pred_check
        %p267 = pneg %p169
      $region34: #{critic_ppo_forward.2} parent=11 // pred_check_branch
        %269 = sbr.rel (%p267) target = $region36
      $region35: #{critic_ppo_forward.2} parent=11 // pred_region
        _
      $region36: #{critic_ppo_forward.2} parent=11 // pred_fallthru
        _
      // Predicated region
      $region37: #{critic_ppo_forward.2} parent=11 // pred_check
        %p270 = pneg %p190
      $region38: #{critic_ppo_forward.2} parent=11 // pred_check_branch
        %272 = sbr.rel (%p270) target = $region40
      $region39: #{critic_ppo_forward.2} parent=11 // pred_region
        _
      $region40: #{critic_ppo_forward.2} parent=11 // pred_fallthru
        _
      // Predicated region
      $region41: #{critic_ppo_forward.2} parent=11 // pred_check
        %p273 = pneg %p211
      $region42: #{critic_ppo_forward.2} parent=11 // pred_check_branch
        %275 = sbr.rel (%p273) target = $region44
      $region43: #{critic_ppo_forward.2} parent=11 // pred_region
        _
      $region44: #{critic_ppo_forward.2} parent=11 // pred_fallthru
        _
    $region12: #{critic_ppo_forward.2} parent=5 // pred_fallthru
      _
    %p276 = scmp.lt.s32.totalorder %s17, 2
    // Predicated region
    $region45: #{critic_ppo_forward.2} parent=5 // pred_check
      %p277 = pneg %p276
    $region46: #{critic_ppo_forward.2} parent=5 // pred_check_branch
      %279 = sbr.rel (%p277) target = $region48
    $region47: #{critic_ppo_forward.2} parent=5 // pred_region
      // Predicated region
      $region49: #{critic_ppo_forward.2} parent=47 // pred_check
        %p280 = pneg %p37
      $region50: #{critic_ppo_forward.2} parent=47 // pred_check_branch
        %282 = sbr.rel (%p280) target = $region52
      $region51: #{critic_ppo_forward.2} parent=47 // pred_region
        %s283 = smul.u32 12, %s17
        %s284 = ssub.s32 25, %s283
        %p285 = scmp.lt.s32.totalorder %s284, 12
        %s286 = scalar_select %p285, %s284, 12
        %s287 = smul.u32 128, %s286
        %p288 = scmp.lt.s32.totalorder %s283, 24
        %s289 = scalar_select %p288, %s283, 24
        %s290 = smul.addr %s289, 8
        %s291 = scalar_lea.vmem %s0, %s290
        %s292 = smul.u32 12, %s17
        %s293 = ssub.s32 25, %s292
        %p294 = scmp.lt.s32.totalorder %s293, 12
        %s295 = scalar_select %p294, %s293, 12
        %s296 = smul.u32 128, %s295
      $region52: #{critic_ppo_forward.2} parent=47 // pred_fallthru
        _
    $region48: #{critic_ppo_forward.2} parent=5 // pred_fallthru
      _
    %p297 = scmp.le.s32.totalorder 1, %s17
    %p298 = scmp.lt.s32.totalorder %s17, 3
    %p299 = pnand %p297, %p298
    %p300 = pneg %p299
    // Predicated region
    $region53: #{critic_ppo_forward.2} parent=5 // pred_check
      _
    $region54: #{critic_ppo_forward.2} parent=5 // pred_check_branch
      %302 = sbr.rel (%p299) target = $region56
    $region55: #{critic_ppo_forward.2} parent=5 // pred_region
      %s303 = ssub.s32 %s17, 1
      %s304 = smul.u32 12, %s22
      %s305 = ssub.s32 25, %s304
      %p306 = scmp.lt.s32.totalorder %s305, 12
      %s307 = scalar_select %p306, %s305, 12
      %s308 = smul.u32 128, %s307
      %p309 = scmp.lt.s32.totalorder %s304, 24
      %s310 = scalar_select %p309, %s304, 24
      %s311 = smul.addr %s310, 8
      %s312 = scalar_lea.vmem %s0, %s311
      %p313 = pneg %p43
      %p314 = pneg %p40
      %p315 = pneg %p64
      %p316 = pneg %p61
      %p317 = pneg %p85
      %p318 = pneg %p82
      %p319 = pneg %p106
      %p320 = pneg %p103
      %p321 = pneg %p127
      %p322 = pneg %p124
      %p323 = pneg %p148
      %p324 = pneg %p145
      %p325 = pneg %p169
      %p326 = pneg %p166
      %p327 = pneg %p190
      %p328 = pneg %p187
      %p329 = pneg %p211
      %p330 = pneg %p208
      %p331 = pneg %p237
      %p332 = pneg %p234
      %s333 = smul.u32 12, %s22
      %p334 = scmp.lt.s32.totalorder %s333, 23
      %s335 = scalar_select %p334, %s333, 23
      %s336 = smul.addr %s335, 8
      %s337 = scalar_lea.vmem %s9, %s336
      %s338 = smul.u32 12, %s22
      %s339 = ssub.s32 25, %s338
      %p340 = scmp.lt.s32.totalorder %s339, 12
      %s341 = scalar_select %p340, %s339, 12
      %s342 = smul.u32 128, %s341
      %p343 = scmp.lt.s32.totalorder %s338, 24
      %s344 = scalar_select %p343, %s338, 24
      %s345 = smul.addr %s344, 8
      %s346 = scalar_lea.vmem %s0, %s345
      %s347 = smul.u32 12, %s22
      %s348 = ssub.s32 25, %s347
      %p349 = scmp.lt.s32.totalorder %s348, 12
      %s350 = scalar_select %p349, %s348, 12
      %s351 = smul.u32 128, %s350
      %s352 = smul.u32 12, %s22
      %p353 = scmp.lt.s32.totalorder %s352, 23
      %s354 = scalar_select %p353, %s352, 23
      %s355 = smul.addr %s354, 8
      %s356 = scalar_lea.vmem %s9, %s355
      %s357 = smul.u32 12, %s22
      %v359 = vld [vmem:[%s346] sm:$0xff]
      %v360 = vld [vmem:[%s346 + $0x8] sm:$0xff]
      %v361 = vld [vmem:[%s346 + $0x10] sm:$0xff]
      %v362 = vld [vmem:[%s346 + $0x18] sm:$0xff]
      %v363 = vld [vmem:[%s346 + $0x20] sm:$0xff]
      %v364 = vld [vmem:[%s346 + $0x28] sm:$0xff]
      %v365 = vld [vmem:[%s346 + $0x30] sm:$0xff]
      %v366 = vld [vmem:[%s346 + $0x38] sm:$0xff]
      %v367 = vld [vmem:[%s346 + $0x40] sm:$0xff]
      %v368 = vld [vmem:[%s346 + $0x48] sm:$0xff]
      %v369 = vld [vmem:[%s346 + $0x50] sm:$0xff]
      %v370 = vld [vmem:[%s346 + $0x58] sm:$0xff]
      %v371 = vpack.c.bf16 %v360, %v359
      %v372 = vpack.c.bf16 %v362, %v361
      %v373 = vpack.c.bf16 %v364, %v363
      %v374 = vpack.c.bf16 %v366, %v365
      %v375 = vpack.c.bf16 %v368, %v367
      %v376 = vpack.c.bf16 %v370, %v369
      %v377 = vld [vmem:[%s1] sm:$0xf]
      %v378 = vld [vmem:[%s1 + $0x4] sm:$0xf]
      %v379 = vld [vmem:[%s2] sm:$0x1]
      %v381 = vlaneseq
      %v382 = vshrl.u32 %v381, 7
      %v383 = vsub.s32 0, %v382
      %v384 = vrot.slane %v379, %v383
      %v388 = vunpack.c.l.b16 %v377
      %v389 = vunpack.c.l.b16 %v378
      %v390 = vpack.c.b16 %v389, %v388
      %vm392 = vcmask 130048
      %v394 = vsel %vm392, %v371, 0
      %v397 = vsel %vm392, %v372, 0
      %v400 = vsel %vm392, %v373, 0
      %v403 = vsel %vm392, %v374, 0
      %v406 = vsel %vm392, %v375, 0
      %v409 = vsel %vm392, %v376, 0
      %411 = vmatprep.subr.bf16.mxu0 0
      %412 = vmatpush1.bf16.msra.mxu0 %v390
      %413 = vmatprep.subr.bf16.mxu0 0
      %414 = vmatpush1.bf16.msra.mxu0 0
      %415 = vmatprep.subr.bf16.mxu0 0
      %416 = vmatpush1.bf16.msra.mxu0 0
      %417 = vmatprep.subr.bf16.mxu0 0
      %418 = vmatpush1.bf16.msra.mxu0 0
      %419 = vmatprep.subr.bf16.mxu0 0
      %420 = vmatpush1.bf16.msra.mxu0 0
      %421 = vmatprep.subr.bf16.mxu0 0
      %422 = vmatpush1.bf16.msra.mxu0 0
      %423 = vmatprep.subr.bf16.mxu0 0
      %424 = vmatpush1.bf16.msra.mxu0 0
      %425 = vmatprep.subr.bf16.mxu0 0
      %426 = vmatpush1.bf16.msra.mxu0 0
      %427 = vmatprep.subr.bf16.mxu0 0
      %428 = vmatpush1.bf16.msra.mxu0 0
      %429 = vmatprep.subr.bf16.mxu0 0
      %430 = vmatpush1.bf16.msra.mxu0 0
      %431 = vmatprep.subr.bf16.mxu0 0
      %432 = vmatpush1.bf16.msra.mxu0 0
      %433 = vmatprep.subr.bf16.mxu0 0
      %434 = vmatpush1.bf16.msra.mxu0 0
      %435 = vmatprep.subr.bf16.mxu0 0
      %436 = vmatpush1.bf16.msra.mxu0 0
      %437 = vmatprep.subr.bf16.mxu0 0
      %438 = vmatpush1.bf16.msra.mxu0 0
      %439 = vmatprep.subr.bf16.mxu0 0
      %440 = vmatpush1.bf16.msra.mxu0 0
      %441 = vmatprep.subr.bf16.mxu0 0
      %442 = vmatpush1.bf16.msra.mxu0 0
      %443 = vmatprep.mubr.bf16.mxu0 0
      %444 = vmatmul.mubr.bf16.gmra.mrb[0].mxu0 %v394
      %v445 = vpop.f32.mrb[0].mxu0
      %v446 = vadd.f32 %v384, %v445
      %v447 = vpop.f32.mrb[0].mxu0
      %v448 = vpop.f32.mrb[0].mxu0
      %v449 = vadd.f32 %v384, %v448
      %v450 = vpop.f32.mrb[0].mxu0
      %451 = vmatprep.mubr.bf16.mxu0 0
      %452 = vmatmul.mubr.bf16.gmra.mrb[0].mxu0 %v397
      %v453 = vpop.f32.mrb[0].mxu0
      %v454 = vadd.f32 %v384, %v453
      %v455 = vpop.f32.mrb[0].mxu0
      %v456 = vpop.f32.mrb[0].mxu0
      %v457 = vadd.f32 %v384, %v456
      %v458 = vpop.f32.mrb[0].mxu0
      %459 = vmatprep.mubr.bf16.mxu0 0
      %460 = vmatmul.mubr.bf16.gmra.mrb[0].mxu0 %v400
      %v461 = vpop.f32.mrb[0].mxu0
      %v462 = vadd.f32 %v384, %v461
      %v463 = vpop.f32.mrb[0].mxu0
      %v464 = vpop.f32.mrb[0].mxu0
      %v465 = vadd.f32 %v384, %v464
      %v466 = vpop.f32.mrb[0].mxu0
      %467 = vmatprep.mubr.bf16.mxu0 0
      %468 = vmatmul.mubr.bf16.gmra.mrb[0].mxu0 %v403
      %v469 = vpop.f32.mrb[0].mxu0
      %v470 = vadd.f32 %v384, %v469
      %v471 = vpop.f32.mrb[0].mxu0
      %v472 = vpop.f32.mrb[0].mxu0
      %v473 = vadd.f32 %v384, %v472
      %v474 = vpop.f32.mrb[0].mxu0
      %475 = vmatprep.mubr.bf16.mxu0 0
      %476 = vmatmul.mubr.bf16.gmra.mrb[0].mxu0 %v406
      %v477 = vpop.f32.mrb[0].mxu0
      %v478 = vadd.f32 %v384, %v477
      %v479 = vpop.f32.mrb[0].mxu0
      %v480 = vpop.f32.mrb[0].mxu0
      %v481 = vadd.f32 %v384, %v480
      %v482 = vpop.f32.mrb[0].mxu0
      %483 = vmatprep.mubr.bf16.mxu0 0
      %484 = vmatmul.mubr.bf16.gmra.mrb[0].mxu0 %v409
      %v485 = vpop.f32.mrb[0].mxu0
      %v486 = vadd.f32 %v384, %v485
      %v487 = vpop.f32.mrb[0].mxu0
      %v488 = vpop.f32.mrb[0].mxu0
      %v489 = vadd.f32 %v384, %v488
      %v490 = vpop.f32.mrb[0].mxu0
      %491 = vdwg.mxu0
      %v492 = vmax.f32 %v446, 0.0
      %v493 = vmax.f32 %v449, 0.0
      %v494 = vmax.f32 %v454, 0.0
      %v495 = vmax.f32 %v457, 0.0
      %v496 = vmax.f32 %v462, 0.0
      %v497 = vmax.f32 %v465, 0.0
      %v498 = vmax.f32 %v470, 0.0
      %v499 = vmax.f32 %v473, 0.0
      %v500 = vmax.f32 %v478, 0.0
      %v501 = vmax.f32 %v481, 0.0
      %v502 = vmax.f32 %v486, 0.0
      %v503 = vmax.f32 %v489, 0.0
      %v504 = vpack.c.bf16 %v493, %v492
      %v505 = vpack.c.bf16 %v495, %v494
      %v506 = vpack.c.bf16 %v497, %v496
      %v507 = vpack.c.bf16 %v499, %v498
      %v508 = vpack.c.bf16 %v501, %v500
      %v509 = vpack.c.bf16 %v503, %v502
      %v510 = vld [vmem:[%s3] sm:$0xf]
      %v511 = vld [vmem:[%s3 + $0x4] sm:$0xf]
      %v512 = vld [vmem:[%s3 + $0x8] sm:$0xf]
      %v513 = vld [vmem:[%s3 + $0xc] sm:$0xf]
      %v514 = vld [vmem:[%s3 + $0x10] sm:$0xf]
      %v515 = vld [vmem:[%s3 + $0x14] sm:$0xf]
      %v516 = vld [vmem:[%s3 + $0x18] sm:$0xf]
      %v517 = vld [vmem:[%s3 + $0x1c] sm:$0xf]
      %v518 = vld [vmem:[%s3 + $0x20] sm:$0xf]
      %v519 = vld [vmem:[%s3 + $0x24] sm:$0xf]
      %v520 = vld [vmem:[%s3 + $0x28] sm:$0xf]
      %v521 = vld [vmem:[%s3 + $0x2c] sm:$0xf]
      %v522 = vld [vmem:[%s3 + $0x30] sm:$0xf]
      %v523 = vld [vmem:[%s3 + $0x34] sm:$0xf]
      %v524 = vld [vmem:[%s3 + $0x38] sm:$0xf]
      %v525 = vld [vmem:[%s3 + $0x3c] sm:$0xf]
      %v526 = vld [vmem:[%s4] sm:$0x1]
      %v528 = vlaneseq
      %v529 = vshrl.u32 %v528, 7
      %v530 = vsub.s32 0, %v529
      %v531 = vrot.slane %v526, %v530
      %v549 = vunpack.c.l.b16 %v510
      %v550 = vunpack.c.l.b16 %v511
      %v551 = vunpack.c.l.b16 %v512
      %v552 = vunpack.c.l.b16 %v513
      %v553 = vunpack.c.l.b16 %v514
      %v554 = vunpack.c.l.b16 %v515
      %v555 = vunpack.c.l.b16 %v516
      %v556 = vunpack.c.l.b16 %v517
      %v557 = vunpack.c.l.b16 %v518
      %v558 = vunpack.c.l.b16 %v519
      %v559 = vunpack.c.l.b16 %v520
      %v560 = vunpack.c.l.b16 %v521
      %v561 = vunpack.c.l.b16 %v522
      %v562 = vunpack.c.l.b16 %v523
      %v563 = vunpack.c.l.b16 %v524
      %v564 = vunpack.c.l.b16 %v525
      %v565 = vpack.c.b16 %v550, %v549
      %v566 = vpack.c.b16 %v552, %v551
      %v567 = vpack.c.b16 %v554, %v553
      %v568 = vpack.c.b16 %v556, %v555
      %v569 = vpack.c.b16 %v558, %v557
      %v570 = vpack.c.b16 %v560, %v559
      %v571 = vpack.c.b16 %v562, %v561
      %v572 = vpack.c.b16 %v564, %v563
      %581 = vmatprep.subr.bf16.mxu0 0
      %582 = vmatpush1.bf16.msra.mxu0 %v565
      %583 = vmatprep.subr.bf16.mxu0 0
      %584 = vmatpush1.bf16.msra.mxu0 %v566
      %585 = vmatprep.subr.bf16.mxu0 0
      %586 = vmatpush1.bf16.msra.mxu0 %v567
      %587 = vmatprep.subr.bf16.mxu0 0
      %588 = vmatpush1.bf16.msra.mxu0 %v568
      %589 = vmatprep.subr.bf16.mxu0 0
      %590 = vmatpush1.bf16.msra.mxu0 %v569
      %591 = vmatprep.subr.bf16.mxu0 0
      %592 = vmatpush1.bf16.msra.mxu0 %v570
      %593 = vmatprep.subr.bf16.mxu0 0
      %594 = vmatpush1.bf16.msra.mxu0 %v571
      %595 = vmatprep.subr.bf16.mxu0 0
      %596 = vmatpush1.bf16.msra.mxu0 %v572
      %597 = vmatprep.subr.bf16.mxu0 0
      %598 = vmatpush1.bf16.msra.mxu0 0
      %599 = vmatprep.subr.bf16.mxu0 0
      %600 = vmatpush1.bf16.msra.mxu0 0
      %601 = vmatprep.subr.bf16.mxu0 0
      %602 = vmatpush1.bf16.msra.mxu0 0
      %603 = vmatprep.subr.bf16.mxu0 0
      %604 = vmatpush1.bf16.msra.mxu0 0
      %605 = vmatprep.subr.bf16.mxu0 0
      %606 = vmatpush1.bf16.msra.mxu0 0
      %607 = vmatprep.subr.bf16.mxu0 0
      %608 = vmatpush1.bf16.msra.mxu0 0
      %609 = vmatprep.subr.bf16.mxu0 0
      %610 = vmatpush1.bf16.msra.mxu0 0
      %611 = vmatprep.subr.bf16.mxu0 0
      %612 = vmatpush1.bf16.msra.mxu0 0
      %613 = vmatprep.mubr.bf16.mxu0 0
      %614 = vmatmul.mubr.bf16.gmra.mrb[0].mxu0 %v504
      %v615 = vpop.f32.mrb[0].mxu0
      %v616 = vadd.f32 %v531, %v615
      %v617 = vpop.f32.mrb[0].mxu0
      %v618 = vpop.f32.mrb[0].mxu0
      %v619 = vadd.f32 %v531, %v618
      %v620 = vpop.f32.mrb[0].mxu0
      %621 = vmatprep.mubr.bf16.mxu0 0
      %622 = vmatmul.mubr.bf16.gmra.mrb[0].mxu0 %v505
      %v623 = vpop.f32.mrb[0].mxu0
      %v624 = vadd.f32 %v531, %v623
      %v625 = vpop.f32.mrb[0].mxu0
      %v626 = vpop.f32.mrb[0].mxu0
      %v627 = vadd.f32 %v531, %v626
      %v628 = vpop.f32.mrb[0].mxu0
      %629 = vmatprep.mubr.bf16.mxu0 0
      %630 = vmatmul.mubr.bf16.gmra.mrb[0].mxu0 %v506
      %v631 = vpop.f32.mrb[0].mxu0
      %v632 = vadd.f32 %v531, %v631
      %v633 = vpop.f32.mrb[0].mxu0
      %v634 = vpop.f32.mrb[0].mxu0
      %v635 = vadd.f32 %v531, %v634
      %v636 = vpop.f32.mrb[0].mxu0
      %637 = vmatprep.mubr.bf16.mxu0 0
      %638 = vmatmul.mubr.bf16.gmra.mrb[0].mxu0 %v507
      %v639 = vpop.f32.mrb[0].mxu0
      %v640 = vadd.f32 %v531, %v639
      %v641 = vpop.f32.mrb[0].mxu0
      %v642 = vpop.f32.mrb[0].mxu0
      %v643 = vadd.f32 %v531, %v642
      %v644 = vpop.f32.mrb[0].mxu0
      %645 = vmatprep.mubr.bf16.mxu0 0
      %646 = vmatmul.mubr.bf16.gmra.mrb[0].mxu0 %v508
      %v647 = vpop.f32.mrb[0].mxu0
      %v648 = vadd.f32 %v531, %v647
      %v649 = vpop.f32.mrb[0].mxu0
      %v650 = vpop.f32.mrb[0].mxu0
      %v651 = vadd.f32 %v531, %v650
      %v652 = vpop.f32.mrb[0].mxu0
      %653 = vmatprep.mubr.bf16.mxu0 0
      %654 = vmatmul.mubr.bf16.gmra.mrb[0].mxu0 %v509
      %v655 = vpop.f32.mrb[0].mxu0
      %v656 = vadd.f32 %v531, %v655
      %v657 = vpop.f32.mrb[0].mxu0
      %v658 = vpop.f32.mrb[0].mxu0
      %v659 = vadd.f32 %v531, %v658
      %v660 = vpop.f32.mrb[0].mxu0
      %661 = vdwg.mxu0
      %v662 = vmax.f32 %v616, 0.0
      %v663 = vmax.f32 %v619, 0.0
      %v664 = vmax.f32 %v624, 0.0
      %v665 = vmax.f32 %v627, 0.0
      %v666 = vmax.f32 %v632, 0.0
      %v667 = vmax.f32 %v635, 0.0
      %v668 = vmax.f32 %v640, 0.0
      %v669 = vmax.f32 %v643, 0.0
      %v670 = vmax.f32 %v648, 0.0
      %v671 = vmax.f32 %v651, 0.0
      %v672 = vmax.f32 %v656, 0.0
      %v673 = vmax.f32 %v659, 0.0
      %v674 = vpack.c.bf16 %v663, %v662
      %v675 = vpack.c.bf16 %v665, %v664
      %v676 = vpack.c.bf16 %v667, %v666
      %v677 = vpack.c.bf16 %v669, %v668
      %v678 = vpack.c.bf16 %v671, %v670
      %v679 = vpack.c.bf16 %v673, %v672
      %v680 = vld [vmem:[%s5] sm:$0xf]
      %v681 = vld [vmem:[%s5 + $0x4] sm:$0xf]
      %v682 = vld [vmem:[%s5 + $0x8] sm:$0xf]
      %v683 = vld [vmem:[%s5 + $0xc] sm:$0xf]
      %v684 = vld [vmem:[%s5 + $0x10] sm:$0xf]
      %v685 = vld [vmem:[%s5 + $0x14] sm:$0xf]
      %v686 = vld [vmem:[%s5 + $0x18] sm:$0xf]
      %v687 = vld [vmem:[%s5 + $0x1c] sm:$0xf]
      %v688 = vld [vmem:[%s5 + $0x20] sm:$0xf]
      %v689 = vld [vmem:[%s5 + $0x24] sm:$0xf]
      %v690 = vld [vmem:[%s5 + $0x28] sm:$0xf]
      %v691 = vld [vmem:[%s5 + $0x2c] sm:$0xf]
      %v692 = vld [vmem:[%s5 + $0x30] sm:$0xf]
      %v693 = vld [vmem:[%s5 + $0x34] sm:$0xf]
      %v694 = vld [vmem:[%s5 + $0x38] sm:$0xf]
      %v695 = vld [vmem:[%s5 + $0x3c] sm:$0xf]
      %v696 = vld [vmem:[%s6] sm:$0x1]
      %v698 = vlaneseq
      %v699 = vshrl.u32 %v698, 7
      %v700 = vsub.s32 0, %v699
      %v701 = vrot.slane %v696, %v700
      %v719 = vunpack.c.l.b16 %v680
      %v720 = vunpack.c.l.b16 %v681
      %v721 = vunpack.c.l.b16 %v682
      %v722 = vunpack.c.l.b16 %v683
      %v723 = vunpack.c.l.b16 %v684
      %v724 = vunpack.c.l.b16 %v685
      %v725 = vunpack.c.l.b16 %v686
      %v726 = vunpack.c.l.b16 %v687
      %v727 = vunpack.c.l.b16 %v688
      %v728 = vunpack.c.l.b16 %v689
      %v729 = vunpack.c.l.b16 %v690
      %v730 = vunpack.c.l.b16 %v691
      %v731 = vunpack.c.l.b16 %v692
      %v732 = vunpack.c.l.b16 %v693
      %v733 = vunpack.c.l.b16 %v694
      %v734 = vunpack.c.l.b16 %v695
      %v735 = vpack.c.b16 %v720, %v719
      %v736 = vpack.c.b16 %v722, %v721
      %v737 = vpack.c.b16 %v724, %v723
      %v738 = vpack.c.b16 %v726, %v725
      %v739 = vpack.c.b16 %v728, %v727
      %v740 = vpack.c.b16 %v730, %v729
      %v741 = vpack.c.b16 %v732, %v731
      %v742 = vpack.c.b16 %v734, %v733
      %751 = vmatprep.subr.bf16.mxu0 0
      %752 = vmatpush1.bf16.msra.mxu0 %v735
      %753 = vmatprep.subr.bf16.mxu0 0
      %754 = vmatpush1.bf16.msra.mxu0 %v736
      %755 = vmatprep.subr.bf16.mxu0 0
      %756 = vmatpush1.bf16.msra.mxu0 %v737
      %757 = vmatprep.subr.bf16.mxu0 0
      %758 = vmatpush1.bf16.msra.mxu0 %v738
      %759 = vmatprep.subr.bf16.mxu0 0
      %760 = vmatpush1.bf16.msra.mxu0 %v739
      %761 = vmatprep.subr.bf16.mxu0 0
      %762 = vmatpush1.bf16.msra.mxu0 %v740
      %763 = vmatprep.subr.bf16.mxu0 0
      %764 = vmatpush1.bf16.msra.mxu0 %v741
      %765 = vmatprep.subr.bf16.mxu0 0
      %766 = vmatpush1.bf16.msra.mxu0 %v742
      %767 = vmatprep.subr.bf16.mxu0 0
      %768 = vmatpush1.bf16.msra.mxu0 0
      %769 = vmatprep.subr.bf16.mxu0 0
      %770 = vmatpush1.bf16.msra.mxu0 0
      %771 = vmatprep.subr.bf16.mxu0 0
      %772 = vmatpush1.bf16.msra.mxu0 0
      %773 = vmatprep.subr.bf16.mxu0 0
      %774 = vmatpush1.bf16.msra.mxu0 0
      %775 = vmatprep.subr.bf16.mxu0 0
      %776 = vmatpush1.bf16.msra.mxu0 0
      %777 = vmatprep.subr.bf16.mxu0 0
      %778 = vmatpush1.bf16.msra.mxu0 0
      %779 = vmatprep.subr.bf16.mxu0 0
      %780 = vmatpush1.bf16.msra.mxu0 0
      %781 = vmatprep.subr.bf16.mxu0 0
      %782 = vmatpush1.bf16.msra.mxu0 0
      %783 = vmatprep.mubr.bf16.mxu0 0
      %784 = vmatmul.mubr.bf16.gmra.mrb[0].mxu0 %v674
      %v785 = vpop.f32.mrb[0].mxu0
      %v786 = vadd.f32 %v701, %v785
      %v787 = vpop.f32.mrb[0].mxu0
      %v788 = vpop.f32.mrb[0].mxu0
      %v789 = vadd.f32 %v701, %v788
      %v790 = vpop.f32.mrb[0].mxu0
      %791 = vmatprep.mubr.bf16.mxu0 0
      %792 = vmatmul.mubr.bf16.gmra.mrb[0].mxu0 %v675
      %v793 = vpop.f32.mrb[0].mxu0
      %v794 = vadd.f32 %v701, %v793
      %v795 = vpop.f32.mrb[0].mxu0
      %v796 = vpop.f32.mrb[0].mxu0
      %v797 = vadd.f32 %v701, %v796
      %v798 = vpop.f32.mrb[0].mxu0
      %799 = vmatprep.mubr.bf16.mxu0 0
      %800 = vmatmul.mubr.bf16.gmra.mrb[0].mxu0 %v676
      %v801 = vpop.f32.mrb[0].mxu0
      %v802 = vadd.f32 %v701, %v801
      %v803 = vpop.f32.mrb[0].mxu0
      %v804 = vpop.f32.mrb[0].mxu0
      %v805 = vadd.f32 %v701, %v804
      %v806 = vpop.f32.mrb[0].mxu0
      %807 = vmatprep.mubr.bf16.mxu0 0
      %808 = vmatmul.mubr.bf16.gmra.mrb[0].mxu0 %v677
      %v809 = vpop.f32.mrb[0].mxu0
      %v810 = vadd.f32 %v701, %v809
      %v811 = vpop.f32.mrb[0].mxu0
      %v812 = vpop.f32.mrb[0].mxu0
      %v813 = vadd.f32 %v701, %v812
      %v814 = vpop.f32.mrb[0].mxu0
      %815 = vmatprep.mubr.bf16.mxu0 0
      %816 = vmatmul.mubr.bf16.gmra.mrb[0].mxu0 %v678
      %v817 = vpop.f32.mrb[0].mxu0
      %v818 = vadd.f32 %v701, %v817
      %v819 = vpop.f32.mrb[0].mxu0
      %v820 = vpop.f32.mrb[0].mxu0
      %v821 = vadd.f32 %v701, %v820
      %v822 = vpop.f32.mrb[0].mxu0
      %823 = vmatprep.mubr.bf16.mxu0 0
      %824 = vmatmul.mubr.bf16.gmra.mrb[0].mxu0 %v679
      %v825 = vpop.f32.mrb[0].mxu0
      %v826 = vadd.f32 %v701, %v825
      %v827 = vpop.f32.mrb[0].mxu0
      %v828 = vpop.f32.mrb[0].mxu0
      %v829 = vadd.f32 %v701, %v828
      %v830 = vpop.f32.mrb[0].mxu0
      %831 = vdwg.mxu0
      %v832 = vadd.f32 %v786, 3.0
      %v833 = vadd.f32 %v789, 3.0
      %v834 = vadd.f32 %v794, 3.0
      %v835 = vadd.f32 %v797, 3.0
      %v836 = vadd.f32 %v802, 3.0
      %v837 = vadd.f32 %v805, 3.0
      %v838 = vadd.f32 %v810, 3.0
      %v839 = vadd.f32 %v813, 3.0
      %v840 = vadd.f32 %v818, 3.0
      %v841 = vadd.f32 %v821, 3.0
      %v842 = vadd.f32 %v826, 3.0
      %v843 = vadd.f32 %v829, 3.0
      %v844 = vmax.f32 %v832, 0.0
      %v845 = vmax.f32 %v833, 0.0
      %v846 = vmax.f32 %v834, 0.0
      %v847 = vmax.f32 %v835, 0.0
      %v848 = vmax.f32 %v836, 0.0
      %v849 = vmax.f32 %v837, 0.0
      %v850 = vmax.f32 %v838, 0.0
      %v851 = vmax.f32 %v839, 0.0
      %v852 = vmax.f32 %v840, 0.0
      %v853 = vmax.f32 %v841, 0.0
      %v854 = vmax.f32 %v842, 0.0
      %v855 = vmax.f32 %v843, 0.0
      %v856 = vmin.f32 %v844, 6.0
      %v857 = vmin.f32 %v845, 6.0
      %v858 = vmin.f32 %v846, 6.0
      %v859 = vmin.f32 %v847, 6.0
      %v860 = vmin.f32 %v848, 6.0
      %v861 = vmin.f32 %v849, 6.0
      %v862 = vmin.f32 %v850, 6.0
      %v863 = vmin.f32 %v851, 6.0
      %v864 = vmin.f32 %v852, 6.0
      %v865 = vmin.f32 %v853, 6.0
      %v866 = vmin.f32 %v854, 6.0
      %v867 = vmin.f32 %v855, 6.0
      %v868 = vmul.f32 %v786, %v856
      %v869 = vmul.f32 %v789, %v857
      %v870 = vmul.f32 %v794, %v858
      %v871 = vmul.f32 %v797, %v859
      %v872 = vmul.f32 %v802, %v860
      %v873 = vmul.f32 %v805, %v861
      %v874 = vmul.f32 %v810, %v862
      %v875 = vmul.f32 %v813, %v863
      %v876 = vmul.f32 %v818, %v864
      %v877 = vmul.f32 %v821, %v865
      %v878 = vmul.f32 %v826, %v866
      %v879 = vmul.f32 %v829, %v867
      %v880 = vmul.f32 %v868, 0.16666667
      %v881 = vmul.f32 %v869, 0.16666667
      %v882 = vmul.f32 %v870, 0.16666667
      %v883 = vmul.f32 %v871, 0.16666667
      %v884 = vmul.f32 %v872, 0.16666667
      %v885 = vmul.f32 %v873, 0.16666667
      %v886 = vmul.f32 %v874, 0.16666667
      %v887 = vmul.f32 %v875, 0.16666667
      %v888 = vmul.f32 %v876, 0.16666667
      %v889 = vmul.f32 %v877, 0.16666667
      %v890 = vmul.f32 %v878, 0.16666667
      %v891 = vmul.f32 %v879, 0.16666667
      %v892 = vld [vmem:[%s7] sm:$0x1]
      %v894 = vlaneseq
      %v895 = vshrl.u32 %v894, 7
      %v896 = vsub.s32 0, %v895
      %v897 = vrot.slane %v892, %v896
      %v899 = vmul.f32 %v880, %v897
      %v900 = vmul.f32 %v881, %v897
      %v901 = vmul.f32 %v882, %v897
      %v902 = vmul.f32 %v883, %v897
      %v903 = vmul.f32 %v884, %v897
      %v904 = vmul.f32 %v885, %v897
      %v905 = vmul.f32 %v886, %v897
      %v906 = vmul.f32 %v887, %v897
      %v907 = vmul.f32 %v888, %v897
      %v908 = vmul.f32 %v889, %v897
      %v909 = vmul.f32 %v890, %v897
      %v910 = vmul.f32 %v891, %v897
      %911 = vadd.xlane.f32.xlu0 %v899
      %v912 = vpop.xlane.xlu0 %911
      %913 = vadd.xlane.f32.xlu0 %v900
      %v914 = vpop.xlane.xlu0 %913
      %915 = vadd.xlane.f32.xlu0 %v901
      %v916 = vpop.xlane.xlu0 %915
      %917 = vadd.xlane.f32.xlu0 %v902
      %v918 = vpop.xlane.xlu0 %917
      %919 = vadd.xlane.f32.xlu0 %v903
      %v920 = vpop.xlane.xlu0 %919
      %921 = vadd.xlane.f32.xlu0 %v904
      %v922 = vpop.xlane.xlu0 %921
      %923 = vadd.xlane.f32.xlu0 %v905
      %v924 = vpop.xlane.xlu0 %923
      %925 = vadd.xlane.f32.xlu0 %v906
      %v926 = vpop.xlane.xlu0 %925
      %927 = vadd.xlane.f32.xlu0 %v907
      %v928 = vpop.xlane.xlu0 %927
      %929 = vadd.xlane.f32.xlu0 %v908
      %v930 = vpop.xlane.xlu0 %929
      %931 = vadd.xlane.f32.xlu0 %v909
      %v932 = vpop.xlane.xlu0 %931
      %933 = vadd.xlane.f32.xlu0 %v910
      %v934 = vpop.xlane.xlu0 %933
      %v935 = vld [vmem:[#allocation2] sm:$0x1]
      %v937 = vlaneseq
      %v938 = vshrl.u32 %v937, 7
      %v939 = vsub.s32 0, %v938
      %v940 = vrot.slane %v935, %v939
      %v942 = vadd.f32 %v912, %v940
      %v943 = vadd.f32 %v914, %v940
      %v944 = vadd.f32 %v916, %v940
      %v945 = vadd.f32 %v918, %v940
      %v946 = vadd.f32 %v920, %v940
      %v947 = vadd.f32 %v922, %v940
      %v948 = vadd.f32 %v924, %v940
      %v949 = vadd.f32 %v926, %v940
      %v950 = vadd.f32 %v928, %v940
      %v951 = vadd.f32 %v930, %v940
      %v952 = vadd.f32 %v932, %v940
      %v953 = vadd.f32 %v934, %v940
      %vm954 = vcmask 7168
      %955 = vst.msk [vmem:[%s356] sm:$0xff] %vm954, %v942
      %956 = vst.msk [vmem:[%s356 + $0x8] sm:$0xff] %vm954, %v943
      %957 = vst.msk [vmem:[%s356 + $0x10] sm:$0xff] %vm954, %v944
      %958 = vst.msk [vmem:[%s356 + $0x18] sm:$0xff] %vm954, %v945
      %959 = vst.msk [vmem:[%s356 + $0x20] sm:$0xff] %vm954, %v946
      %960 = vst.msk [vmem:[%s356 + $0x28] sm:$0xff] %vm954, %v947
      %961 = vst.msk [vmem:[%s356 + $0x30] sm:$0xff] %vm954, %v948
      %962 = vst.msk [vmem:[%s356 + $0x38] sm:$0xff] %vm954, %v949
      %963 = vst.msk [vmem:[%s356 + $0x40] sm:$0xff] %vm954, %v950
      %964 = vst.msk [vmem:[%s356 + $0x48] sm:$0xff] %vm954, %v951
      %965 = vst.msk [vmem:[%s356 + $0x50] sm:$0xff] %vm954, %v952
      %966 = vst.msk [vmem:[%s356 + $0x58] sm:$0xff] %vm954, %v953
      %s967 = smul.u32 12, %s22
      %p968 = scmp.lt.s32.totalorder %s967, 23
      %s969 = scalar_select %p968, %s967, 23
      %s970 = smul.addr %s969, 8
      %s971 = scalar_lea.vmem %s9, %s970
      // Predicated region
      $region57: #{critic_ppo_forward.2} parent=55 // pred_check
        %p972 = pneg %p234
      $region58: #{critic_ppo_forward.2} parent=55 // pred_check_branch
        %974 = sbr.rel (%p972) target = $region60
      $region59: #{critic_ppo_forward.2} parent=55 // pred_region
        %s975 = smul.u32 12, %s22
      $region60: #{critic_ppo_forward.2} parent=55 // pred_fallthru
        _
    $region56: #{critic_ppo_forward.2} parent=5 // pred_fallthru
      _
    %p976 = scmp.le.s32.totalorder 2, %s17
    // Predicated region
    $region61: #{critic_ppo_forward.2} parent=5 // pred_check
      %p977 = pneg %p976
    $region62: #{critic_ppo_forward.2} parent=5 // pred_check_branch
      %979 = sbr.rel (%p977) target = $region64
    $region63: #{critic_ppo_forward.2} parent=5 // pred_region
      %s980 = ssub.s32 %s17, 2
      // Predicated region
      $region65: #{critic_ppo_forward.2} parent=63 // pred_check
        %p981 = pneg %p240
      $region66: #{critic_ppo_forward.2} parent=63 // pred_check_branch
        %983 = sbr.rel (%p981) target = $region68
      $region67: #{critic_ppo_forward.2} parent=63 // pred_region
        %s984 = smul.u32 12, %s23
        %p985 = scmp.lt.s32.totalorder %s984, 23
        %s986 = scalar_select %p985, %s984, 23
        %s987 = smul.addr %s986, 8
        %s988 = scalar_lea.vmem %s9, %s987
      $region68: #{critic_ppo_forward.2} parent=63 // pred_fallthru
        _
    $region64: #{critic_ppo_forward.2} parent=5 // pred_fallthru
      _
  $region6: #{critic_ppo_forward.2} parent=0 // loop_footer
    %s21 = sadd.s32 1, %s17
  $region7: #{critic_ppo_forward.2} parent=0 // loop_footer_branch
    %16 = sbr.rel target = $region3
  $region8: #{critic_ppo_forward.2} parent=0 // loop_exit
    _

</llo_original>
